<compile_context>
chip_gen: v7x
topology: tpu7x:2x2x1
jax: 0.10.0
libtpu: 0.0.40
codegen_flags: <defaults>
</compile_context>

<pallas_src>
import functools
import math

import jax
import jax.numpy as jnp
from jax.experimental import pallas as pl
from jax.experimental.pallas import tpu as pltpu

LN_EPS = 1e-12  # config.layer_norm_eps (BERT default)


# ----------------------------------------------------------------------------
# Fused Pallas kernel: one grid step == one batch element
# ----------------------------------------------------------------------------

def bert_cross_attention_kernel(
    s1_ref,    # [1, S1, H]  f32
    s2_ref,    # [1, S2, H]  f32
    mask_ref,  # [1, 1,  S2] f32 (additive mask, 0 / -10000)
    wq_ref,    # [nh, H, dh] bf16
    bq_ref,    # [nh, 1, dh] f32
    wk_ref,    # [nh, H, dh] bf16
    bk_ref,    # [nh, 1, dh] f32
    wv_ref,    # [nh, H, dh] bf16
    bv_ref,    # [nh, 1, dh] f32
    wo_ref,    # [nh, dh, H] bf16
    bo_ref,    # [1, H]      f32
    g_ref,     # [1, H]      f32 (LayerNorm gamma)
    bln_ref,   # [1, H]      f32 (LayerNorm beta)
    o_ref,     # [1, S1, H]  f32
    *,
    num_heads,
    scale,
):
    s1 = s1_ref[0]                       # [S1, H] f32 (kept for residual)
    s2 = s2_ref[0]                       # [S2, H] f32
    mask = mask_ref[0]                   # [1, S2] f32, broadcasts over queries

    s1_b = s1.astype(jnp.bfloat16)
    s2_b = s2.astype(jnp.bfloat16)

    S1, H = s1.shape
    acc = jnp.zeros((S1, H), jnp.float32)   # accumulated output projection

    # Static (unrolled) loop over heads; per-head weights are leading-dim
    # indexed 3-D VMEM refs, so there is no lane-dim slicing in the kernel.
    for h in range(num_heads):
        q_h = jnp.dot(s1_b, wq_ref[h],
                      preferred_element_type=jnp.float32) + bq_ref[h]   # [S1, dh]
        k_h = jnp.dot(s2_b, wk_ref[h],
                      preferred_element_type=jnp.float32) + bk_ref[h]   # [S2, dh]
        v_h = jnp.dot(s2_b, wv_ref[h],
                      preferred_element_type=jnp.float32) + bv_ref[h]   # [S2, dh]

        # scores = Q Kᵀ / sqrt(dh) + mask     -> [S1, S2]
        scores = jax.lax.dot_general(
            q_h.astype(jnp.bfloat16), k_h.astype(jnp.bfloat16),
            (((1,), (1,)), ((), ())),
            preferred_element_type=jnp.float32)
        scores = scores * scale + mask

        # softmax over S2 (f32 on VPU/EUP)
        m = jnp.max(scores, axis=-1, keepdims=True)
        e = jnp.exp(scores - m)
        denom = jnp.sum(e, axis=-1, keepdims=True)
        probs = e * pl.reciprocal(denom, approx=True)
        # TODO(synk): attention-prob dropout is identity in eval mode.

        # context_h = probs @ V_h             -> [S1, dh]
        ctx_h = jnp.dot(probs.astype(jnp.bfloat16), v_h.astype(jnp.bfloat16),
                        preferred_element_type=jnp.float32)

        # output projection accumulated over heads:
        #   concat_h(ctx_h) @ Wo == sum_h ctx_h @ Wo[h*dh:(h+1)*dh, :]
        acc = acc + jnp.dot(ctx_h.astype(jnp.bfloat16), wo_ref[h],
                            preferred_element_type=jnp.float32)

    # BertSelfOutput: dense bias + (dropout: identity) + residual + LayerNorm
    x = acc + bo_ref[...] + s1                                   # [S1, H] f32
    mu = jnp.mean(x, axis=-1, keepdims=True)
    var = jnp.mean((x - mu) ** 2, axis=-1, keepdims=True)
    xn = (x - mu) * jax.lax.rsqrt(var + LN_EPS)
    o_ref[0] = (xn * g_ref[...] + bln_ref[...]).astype(o_ref.dtype)


# ----------------------------------------------------------------------------
# Wrapper: weight packing + pallas_call
# ----------------------------------------------------------------------------

def _batched(shape):
    """Block = one batch element; indexed by the grid axis."""
    nd = len(shape)
    return pl.BlockSpec((1,) + tuple(shape[1:]),
                        lambda b, _nd=nd: (b,) + (0,) * (_nd - 1))


def _replicated(shape):
    """Whole-array block reused across the grid (weights / biases)."""
    nd = len(shape)
    return pl.BlockSpec(tuple(shape), lambda b, _nd=nd: (0,) * _nd)


def bert_cross_attention(params, s1, s2, mask, *, num_heads):
    """s1:[B,S1,H] s2:[B,S2,H] mask:[B,1,S2] additive -> [B,S1,H]."""
    B, S1, H = s1.shape
    S2 = s2.shape[1]
    assert H % num_heads == 0
    dh = H // num_heads

    f32 = jnp.float32
    bf16 = jnp.bfloat16

    # Per-head weight layout (done once, outside the kernel):
    #   Wq/Wk/Wv: [H, H] -> [nh, H, dh] ;  Wo: [H, H] -> [nh, dh, H]
    wq = params["wq"].reshape(H, num_heads, dh).transpose(1, 0, 2).astype(bf16)
    wk = params["wk"].reshape(H, num_heads, dh).transpose(1, 0, 2).astype(bf16)
    wv = params["wv"].reshape(H, num_heads, dh).transpose(1, 0, 2).astype(bf16)
    wo = params["wo"].reshape(num_heads, dh, H).astype(bf16)
    bq = params["bq"].reshape(num_heads, 1, dh).astype(f32)
    bk = params["bk"].reshape(num_heads, 1, dh).astype(f32)
    bv = params["bv"].reshape(num_heads, 1, dh).astype(f32)
    bo = params["bo"].reshape(1, H).astype(f32)
    gamma = params["gamma"].reshape(1, H).astype(f32)
    beta = params["beta"].reshape(1, H).astype(f32)

    kern = functools.partial(bert_cross_attention_kernel,
                             num_heads=num_heads,
                             scale=1.0 / math.sqrt(dh))

    return pl.pallas_call(
        kern,
        out_shape=jax.ShapeDtypeStruct((B, S1, H), f32),
        grid=(B,),
        in_specs=[
            _batched((B, S1, H)),        # s1
            _batched((B, S2, H)),        # s2
            _batched((B, 1, S2)),        # mask
            _replicated(wq.shape), _replicated(bq.shape),
            _replicated(wk.shape), _replicated(bk.shape),
            _replicated(wv.shape), _replicated(bv.shape),
            _replicated(wo.shape), _replicated(bo.shape),
            _replicated(gamma.shape), _replicated(beta.shape),
        ],
        out_specs=_batched((B, S1, H)),
        compiler_params=pltpu.CompilerParams(
            dimension_semantics=("parallel",),   # shard batch across TCs (v7x)
            vmem_limit_bytes=32 * 1024 * 1024,   # tiny working set; safe on 64 MiB v7x
        ),
    )(s1, s2, mask, wq, bq, wk, bk, wv, bv, wo, bo, gamma, beta)


# ----------------------------------------------------------------------------
# Pure-JAX reference (for a loose self-check)
# ----------------------------------------------------------------------------

def reference_forward(params, s1, s2, mask, *, num_heads):
    B, S1, H = s1.shape
    dh = H // num_heads

    def split(x):
        b, s, _ = x.shape
        return x.reshape(b, s, num_heads, dh).transpose(0, 2, 1, 3)

    q = split(s1 @ params["wq"] + params["bq"])
    k = split(s2 @ params["wk"] + params["bk"])
    v = split(s2 @ params["wv"] + params["bv"])
    scores = jnp.einsum("bhqd,bhkd->bhqk", q, k) / math.sqrt(dh)
    scores = scores + mask[:, None, :, :]            # [B,1,1,S2] broadcast
    probs = jax.nn.softmax(scores, axis=-1)
    ctx = jnp.einsum("bhqk,bhkd->bhqd", probs, v)
    ctx = ctx.transpose(0, 2, 1, 3).reshape(B, S1, H)
    out = ctx @ params["wo"] + params["bo"]
    x = out + s1
    mu = x.mean(-1, keepdims=True)
    var = ((x - mu) ** 2).mean(-1, keepdims=True)
    return (x - mu) * jax.lax.rsqrt(var + LN_EPS) * params["gamma"] + params["beta"]


# ----------------------------------------------------------------------------
# Demo
# ----------------------------------------------------------------------------

if __name__ == "__main__":
    key = jax.random.PRNGKey(0)
    ks = jax.random.split(key, 12)

    # Small BERT-like config: batch=2, s1 len=8, s2 len=16, hidden=128, 4 heads.
    B, S1, S2, H, NH = 2, 8, 16, 128, 4
    w_scale = 0.02

    params = {
        "wq": w_scale * jax.random.normal(ks[0], (H, H), jnp.float32),
        "bq": w_scale * jax.random.normal(ks[1], (H,), jnp.float32),
        "wk": w_scale * jax.random.normal(ks[2], (H, H), jnp.float32),
        "bk": w_scale * jax.random.normal(ks[3], (H,), jnp.float32),
        "wv": w_scale * jax.random.normal(ks[4], (H, H), jnp.float32),
        "bv": w_scale * jax.random.normal(ks[5], (H,), jnp.float32),
        "wo": w_scale * jax.random.normal(ks[6], (H, H), jnp.float32),
        "bo": w_scale * jax.random.normal(ks[7], (H,), jnp.float32),
        "gamma": 1.0 + 0.1 * jax.random.normal(ks[8], (H,), jnp.float32),
        "beta": 0.1 * jax.random.normal(ks[9], (H,), jnp.float32),
    }

    s1_input = jax.random.normal(ks[10], (B, S1, H), jnp.float32)
    s2_input = jax.random.normal(ks[11], (B, S2, H), jnp.float32)

    # Additive attention mask (BERT extended-mask convention: 0 valid, -1e4 pad).
    valid_len = jnp.array([S2, S2 - 4], dtype=jnp.int32)
    pos = jnp.arange(S2)[None, :]
    s2_attention_mask = jnp.where(pos < valid_len[:, None], 0.0, -10000.0)
    s2_attention_mask = s2_attention_mask.astype(jnp.float32)[:, None, :]  # [B,1,S2]

    out = bert_cross_attention(params, s1_input, s2_input, s2_attention_mask,
                               num_heads=NH)
    jax.block_until_ready(out)

    ref = reference_forward(params, s1_input, s2_input, s2_attention_mask,
                            num_heads=NH)

    assert out.shape == (B, S1, H)
    assert bool(jnp.all(jnp.isfinite(out)))
    # Loose tolerance: kernel uses bf16 matmul operands + approx reciprocal.
    assert bool(jnp.allclose(out, ref, atol=5e-2, rtol=5e-2))
    print("KERNEL_OK")
</pallas_src>

<mosaic_0001>
module attributes {stable_mosaic.version = 11 : i64} {
  func.func @bert_cross_attention_kernel(%arg0: i32, %arg1: memref<1x8x128xf32, #tpu.memory_space<vmem>>, %arg2: memref<1x16x128xf32, #tpu.memory_space<vmem>>, %arg3: memref<1x1x16xf32, #tpu.memory_space<vmem>>, %arg4: memref<4x128x32xbf16, #tpu.memory_space<vmem>>, %arg5: memref<4x1x32xf32, #tpu.memory_space<vmem>>, %arg6: memref<4x128x32xbf16, #tpu.memory_space<vmem>>, %arg7: memref<4x1x32xf32, #tpu.memory_space<vmem>>, %arg8: memref<4x128x32xbf16, #tpu.memory_space<vmem>>, %arg9: memref<4x1x32xf32, #tpu.memory_space<vmem>>, %arg10: memref<4x32x128xbf16, #tpu.memory_space<vmem>>, %arg11: memref<1x128xf32, #tpu.memory_space<vmem>>, %arg12: memref<1x128xf32, #tpu.memory_space<vmem>>, %arg13: memref<1x128xf32, #tpu.memory_space<vmem>>, %arg14: memref<1x8x128xf32, #tpu.memory_space<vmem>>) attributes {dimension_semantics = [#tpu.dimension_semantics<parallel>], iteration_bounds = array<i64: 2>, scalar_prefetch = 0 : i64, scratch_operands = 0 : i64, tpu.core_type = #tpu.core_type<tc>, window_params = [{transform_indices = @transform_0, window_bounds = array<i64: 1, 8, 128>}, {transform_indices = @transform_1, window_bounds = array<i64: 1, 16, 128>}, {transform_indices = @transform_2, window_bounds = array<i64: 1, 1, 16>}, {pipeline_mode = #tpu.pipeline_mode<synchronous>, transform_indices = @transform_3, window_bounds = array<i64: 4, 128, 32>}, {pipeline_mode = #tpu.pipeline_mode<synchronous>, transform_indices = @transform_4, window_bounds = array<i64: 4, 1, 32>}, {pipeline_mode = #tpu.pipeline_mode<synchronous>, transform_indices = @transform_5, window_bounds = array<i64: 4, 128, 32>}, {pipeline_mode = #tpu.pipeline_mode<synchronous>, transform_indices = @transform_6, window_bounds = array<i64: 4, 1, 32>}, {pipeline_mode = #tpu.pipeline_mode<synchronous>, transform_indices = @transform_7, window_bounds = array<i64: 4, 128, 32>}, {pipeline_mode = #tpu.pipeline_mode<synchronous>, transform_indices = @transform_8, window_bounds = array<i64: 4, 1, 32>}, {pipeline_mode = #tpu.pipeline_mode<synchronous>, transform_indices = @transform_9, window_bounds = array<i64: 4, 32, 128>}, {pipeline_mode = #tpu.pipeline_mode<synchronous>, transform_indices = @transform_10, window_bounds = array<i64: 1, 128>}, {pipeline_mode = #tpu.pipeline_mode<synchronous>, transform_indices = @transform_11, window_bounds = array<i64: 1, 128>}, {pipeline_mode = #tpu.pipeline_mode<synchronous>, transform_indices = @transform_12, window_bounds = array<i64: 1, 128>}, {transform_indices = @transform_13, window_bounds = array<i64: 1, 8, 128>}]} {
    %c0 = arith.constant 0 : index
    %c0_0 = arith.constant 0 : index
    %c0_1 = arith.constant 0 : index
    %0 = vector.load %arg1[%c0, %c0_0, %c0_1] : memref<1x8x128xf32, #tpu.memory_space<vmem>>, vector<1x8x128xf32>
    %1 = vector.shape_cast %0 : vector<1x8x128xf32> to vector<8x128xf32>
    %c0_2 = arith.constant 0 : index
    %c0_3 = arith.constant 0 : index
    %c0_4 = arith.constant 0 : index
    %2 = vector.load %arg2[%c0_2, %c0_3, %c0_4] : memref<1x16x128xf32, #tpu.memory_space<vmem>>, vector<1x16x128xf32>
    %3 = vector.shape_cast %2 : vector<1x16x128xf32> to vector<16x128xf32>
    %c0_5 = arith.constant 0 : index
    %c0_6 = arith.constant 0 : index
    %c0_7 = arith.constant 0 : index
    %4 = vector.load %arg3[%c0_5, %c0_6, %c0_7] : memref<1x1x16xf32, #tpu.memory_space<vmem>>, vector<1x1x16xf32>
    %5 = vector.shape_cast %4 : vector<1x1x16xf32> to vector<1x16xf32>
    %6 = arith.truncf %1 : vector<8x128xf32> to vector<8x128xbf16>
    %7 = arith.truncf %3 : vector<16x128xf32> to vector<16x128xbf16>
    %cst = arith.constant 0.000000e+00 : f32
    %8 = vector.broadcast %cst : f32 to vector<8x128xf32>
    %c0_8 = arith.constant 0 : index
    %c0_9 = arith.constant 0 : index
    %c0_10 = arith.constant 0 : index
    %9 = vector.load %arg4[%c0_8, %c0_9, %c0_10] : memref<4x128x32xbf16, #tpu.memory_space<vmem>>, vector<1x128x32xbf16>
    %10 = vector.shape_cast %9 : vector<1x128x32xbf16> to vector<128x32xbf16>
    %cst_11 = arith.constant dense<0.000000e+00> : vector<8x32xf32>
    %11 = tpu.matmul %6, %10, %cst_11 {dimension_numbers = #tpu.dot_dimension_numbers<[1], [0], [0], [1], [0, 0, 1, 1], [], []>} : vector<8x128xbf16>, vector<128x32xbf16>, vector<8x32xf32> -> vector<8x32xf32>
    %c0_12 = arith.constant 0 : index
    %c0_13 = arith.constant 0 : index
    %c0_14 = arith.constant 0 : index
    %12 = vector.load %arg5[%c0_12, %c0_13, %c0_14] : memref<4x1x32xf32, #tpu.memory_space<vmem>>, vector<1x1x32xf32>
    %13 = vector.shape_cast %12 : vector<1x1x32xf32> to vector<1x32xf32>
    %14 = vector.broadcast %13 : vector<1x32xf32> to vector<8x32xf32>
    %15 = arith.addf %11, %14 : vector<8x32xf32>
    %c0_15 = arith.constant 0 : index
    %c0_16 = arith.constant 0 : index
    %c0_17 = arith.constant 0 : index
    %16 = vector.load %arg6[%c0_15, %c0_16, %c0_17] : memref<4x128x32xbf16, #tpu.memory_space<vmem>>, vector<1x128x32xbf16>
    %17 = vector.shape_cast %16 : vector<1x128x32xbf16> to vector<128x32xbf16>
    %cst_18 = arith.constant dense<0.000000e+00> : vector<16x32xf32>
    %18 = tpu.matmul %7, %17, %cst_18 {dimension_numbers = #tpu.dot_dimension_numbers<[1], [0], [0], [1], [0, 0, 1, 1], [], []>} : vector<16x128xbf16>, vector<128x32xbf16>, vector<16x32xf32> -> vector<16x32xf32>
    %c0_19 = arith.constant 0 : index
    %c0_20 = arith.constant 0 : index
    %c0_21 = arith.constant 0 : index
    %19 = vector.load %arg7[%c0_19, %c0_20, %c0_21] : memref<4x1x32xf32, #tpu.memory_space<vmem>>, vector<1x1x32xf32>
    %20 = vector.shape_cast %19 : vector<1x1x32xf32> to vector<1x32xf32>
    %21 = vector.broadcast %20 : vector<1x32xf32> to vector<16x32xf32>
    %22 = arith.addf %18, %21 : vector<16x32xf32>
    %c0_22 = arith.constant 0 : index
    %c0_23 = arith.constant 0 : index
    %c0_24 = arith.constant 0 : index
    %23 = vector.load %arg8[%c0_22, %c0_23, %c0_24] : memref<4x128x32xbf16, #tpu.memory_space<vmem>>, vector<1x128x32xbf16>
    %24 = vector.shape_cast %23 : vector<1x128x32xbf16> to vector<128x32xbf16>
    %cst_25 = arith.constant dense<0.000000e+00> : vector<16x32xf32>
    %25 = tpu.matmul %7, %24, %cst_25 {dimension_numbers = #tpu.dot_dimension_numbers<[1], [0], [0], [1], [0, 0, 1, 1], [], []>} : vector<16x128xbf16>, vector<128x32xbf16>, vector<16x32xf32> -> vector<16x32xf32>
    %c0_26 = arith.constant 0 : index
    %c0_27 = arith.constant 0 : index
    %c0_28 = arith.constant 0 : index
    %26 = vector.load %arg9[%c0_26, %c0_27, %c0_28] : memref<4x1x32xf32, #tpu.memory_space<vmem>>, vector<1x1x32xf32>
    %27 = vector.shape_cast %26 : vector<1x1x32xf32> to vector<1x32xf32>
    %28 = vector.broadcast %27 : vector<1x32xf32> to vector<16x32xf32>
    %29 = arith.addf %25, %28 : vector<16x32xf32>
    %30 = arith.truncf %15 : vector<8x32xf32> to vector<8x32xbf16>
    %31 = arith.truncf %22 : vector<16x32xf32> to vector<16x32xbf16>
    %cst_29 = arith.constant dense<0.000000e+00> : vector<8x16xf32>
    %32 = tpu.matmul %30, %31, %cst_29 {dimension_numbers = #tpu.dot_dimension_numbers<[1], [1], [0], [0], [0, 0, 1, 0], [], []>} : vector<8x32xbf16>, vector<16x32xbf16>, vector<8x16xf32> -> vector<8x16xf32>
    %cst_30 = arith.constant 0.176776692 : f32
    %33 = vector.broadcast %cst_30 : f32 to vector<8x16xf32>
    %34 = arith.mulf %32, %33 : vector<8x16xf32>
    %35 = vector.broadcast %5 : vector<1x16xf32> to vector<8x16xf32>
    %36 = arith.addf %34, %35 : vector<8x16xf32>
    %cst_31 = arith.constant dense<0xFF800000> : vector<8xf32>
    %37 = vector.multi_reduction <maximumf>, %36, %cst_31 [1] : vector<8x16xf32> to vector<8xf32>
    %38 = vector.shape_cast %37 : vector<8xf32> to vector<8x1xf32>
    %39 = vector.broadcast %38 : vector<8x1xf32> to vector<8x16xf32>
    %40 = arith.subf %36, %39 : vector<8x16xf32>
    %41 = math.exp %40 : vector<8x16xf32>
    %cst_32 = arith.constant dense<0.000000e+00> : vector<8xf32>
    %42 = vector.multi_reduction <add>, %41, %cst_32 [1] : vector<8x16xf32> to vector<8xf32>
    %43 = vector.shape_cast %42 : vector<8xf32> to vector<8x1xf32>
    %44 = tpu.reciprocal %43 {approx = true} : vector<8x1xf32> -> vector<8x1xf32>
    %45 = vector.broadcast %44 : vector<8x1xf32> to vector<8x16xf32>
    %46 = arith.mulf %41, %45 : vector<8x16xf32>
    %47 = arith.truncf %46 : vector<8x16xf32> to vector<8x16xbf16>
    %48 = arith.truncf %29 : vector<16x32xf32> to vector<16x32xbf16>
    %cst_33 = arith.constant dense<0.000000e+00> : vector<8x32xf32>
    %49 = tpu.matmul %47, %48, %cst_33 {dimension_numbers = #tpu.dot_dimension_numbers<[1], [0], [0], [1], [0, 0, 1, 1], [], []>} : vector<8x16xbf16>, vector<16x32xbf16>, vector<8x32xf32> -> vector<8x32xf32>
    %50 = arith.truncf %49 : vector<8x32xf32> to vector<8x32xbf16>
    %c0_34 = arith.constant 0 : index
    %c0_35 = arith.constant 0 : index
    %c0_36 = arith.constant 0 : index
    %51 = vector.load %arg10[%c0_34, %c0_35, %c0_36] : memref<4x32x128xbf16, #tpu.memory_space<vmem>>, vector<1x32x128xbf16>
    %52 = vector.shape_cast %51 : vector<1x32x128xbf16> to vector<32x128xbf16>
    %cst_37 = arith.constant dense<0.000000e+00> : vector<8x128xf32>
    %53 = tpu.matmul %50, %52, %cst_37 {dimension_numbers = #tpu.dot_dimension_numbers<[1], [0], [0], [1], [0, 0, 1, 1], [], []>} : vector<8x32xbf16>, vector<32x128xbf16>, vector<8x128xf32> -> vector<8x128xf32>
    %54 = arith.addf %8, %53 : vector<8x128xf32>
    %c1 = arith.constant 1 : index
    %c0_38 = arith.constant 0 : index
    %c0_39 = arith.constant 0 : index
    %55 = vector.load %arg4[%c1, %c0_38, %c0_39] : memref<4x128x32xbf16, #tpu.memory_space<vmem>>, vector<1x128x32xbf16>
    %56 = vector.shape_cast %55 : vector<1x128x32xbf16> to vector<128x32xbf16>
    %cst_40 = arith.constant dense<0.000000e+00> : vector<8x32xf32>
    %57 = tpu.matmul %6, %56, %cst_40 {dimension_numbers = #tpu.dot_dimension_numbers<[1], [0], [0], [1], [0, 0, 1, 1], [], []>} : vector<8x128xbf16>, vector<128x32xbf16>, vector<8x32xf32> -> vector<8x32xf32>
    %c1_41 = arith.constant 1 : index
    %c0_42 = arith.constant 0 : index
    %c0_43 = arith.constant 0 : index
    %58 = vector.load %arg5[%c1_41, %c0_42, %c0_43] : memref<4x1x32xf32, #tpu.memory_space<vmem>>, vector<1x1x32xf32>
    %59 = vector.shape_cast %58 : vector<1x1x32xf32> to vector<1x32xf32>
    %60 = vector.broadcast %59 : vector<1x32xf32> to vector<8x32xf32>
    %61 = arith.addf %57, %60 : vector<8x32xf32>
    %c1_44 = arith.constant 1 : index
    %c0_45 = arith.constant 0 : index
    %c0_46 = arith.constant 0 : index
    %62 = vector.load %arg6[%c1_44, %c0_45, %c0_46] : memref<4x128x32xbf16, #tpu.memory_space<vmem>>, vector<1x128x32xbf16>
    %63 = vector.shape_cast %62 : vector<1x128x32xbf16> to vector<128x32xbf16>
    %cst_47 = arith.constant dense<0.000000e+00> : vector<16x32xf32>
    %64 = tpu.matmul %7, %63, %cst_47 {dimension_numbers = #tpu.dot_dimension_numbers<[1], [0], [0], [1], [0, 0, 1, 1], [], []>} : vector<16x128xbf16>, vector<128x32xbf16>, vector<16x32xf32> -> vector<16x32xf32>
    %c1_48 = arith.constant 1 : index
    %c0_49 = arith.constant 0 : index
    %c0_50 = arith.constant 0 : index
    %65 = vector.load %arg7[%c1_48, %c0_49, %c0_50] : memref<4x1x32xf32, #tpu.memory_space<vmem>>, vector<1x1x32xf32>
    %66 = vector.shape_cast %65 : vector<1x1x32xf32> to vector<1x32xf32>
    %67 = vector.broadcast %66 : vector<1x32xf32> to vector<16x32xf32>
    %68 = arith.addf %64, %67 : vector<16x32xf32>
    %c1_51 = arith.constant 1 : index
    %c0_52 = arith.constant 0 : index
    %c0_53 = arith.constant 0 : index
    %69 = vector.load %arg8[%c1_51, %c0_52, %c0_53] : memref<4x128x32xbf16, #tpu.memory_space<vmem>>, vector<1x128x32xbf16>
    %70 = vector.shape_cast %69 : vector<1x128x32xbf16> to vector<128x32xbf16>
    %cst_54 = arith.constant dense<0.000000e+00> : vector<16x32xf32>
    %71 = tpu.matmul %7, %70, %cst_54 {dimension_numbers = #tpu.dot_dimension_numbers<[1], [0], [0], [1], [0, 0, 1, 1], [], []>} : vector<16x128xbf16>, vector<128x32xbf16>, vector<16x32xf32> -> vector<16x32xf32>
    %c1_55 = arith.constant 1 : index
    %c0_56 = arith.constant 0 : index
    %c0_57 = arith.constant 0 : index
    %72 = vector.load %arg9[%c1_55, %c0_56, %c0_57] : memref<4x1x32xf32, #tpu.memory_space<vmem>>, vector<1x1x32xf32>
    %73 = vector.shape_cast %72 : vector<1x1x32xf32> to vector<1x32xf32>
    %74 = vector.broadcast %73 : vector<1x32xf32> to vector<16x32xf32>
    %75 = arith.addf %71, %74 : vector<16x32xf32>
    %76 = arith.truncf %61 : vector<8x32xf32> to vector<8x32xbf16>
    %77 = arith.truncf %68 : vector<16x32xf32> to vector<16x32xbf16>
    %cst_58 = arith.constant dense<0.000000e+00> : vector<8x16xf32>
    %78 = tpu.matmul %76, %77, %cst_58 {dimension_numbers = #tpu.dot_dimension_numbers<[1], [1], [0], [0], [0, 0, 1, 0], [], []>} : vector<8x32xbf16>, vector<16x32xbf16>, vector<8x16xf32> -> vector<8x16xf32>
    %cst_59 = arith.constant 0.176776692 : f32
    %79 = vector.broadcast %cst_59 : f32 to vector<8x16xf32>
    %80 = arith.mulf %78, %79 : vector<8x16xf32>
    %81 = vector.broadcast %5 : vector<1x16xf32> to vector<8x16xf32>
    %82 = arith.addf %80, %81 : vector<8x16xf32>
    %cst_60 = arith.constant dense<0xFF800000> : vector<8xf32>
    %83 = vector.multi_reduction <maximumf>, %82, %cst_60 [1] : vector<8x16xf32> to vector<8xf32>
    %84 = vector.shape_cast %83 : vector<8xf32> to vector<8x1xf32>
    %85 = vector.broadcast %84 : vector<8x1xf32> to vector<8x16xf32>
    %86 = arith.subf %82, %85 : vector<8x16xf32>
    %87 = math.exp %86 : vector<8x16xf32>
    %cst_61 = arith.constant dense<0.000000e+00> : vector<8xf32>
    %88 = vector.multi_reduction <add>, %87, %cst_61 [1] : vector<8x16xf32> to vector<8xf32>
    %89 = vector.shape_cast %88 : vector<8xf32> to vector<8x1xf32>
    %90 = tpu.reciprocal %89 {approx = true} : vector<8x1xf32> -> vector<8x1xf32>
    %91 = vector.broadcast %90 : vector<8x1xf32> to vector<8x16xf32>
    %92 = arith.mulf %87, %91 : vector<8x16xf32>
    %93 = arith.truncf %92 : vector<8x16xf32> to vector<8x16xbf16>
    %94 = arith.truncf %75 : vector<16x32xf32> to vector<16x32xbf16>
    %cst_62 = arith.constant dense<0.000000e+00> : vector<8x32xf32>
    %95 = tpu.matmul %93, %94, %cst_62 {dimension_numbers = #tpu.dot_dimension_numbers<[1], [0], [0], [1], [0, 0, 1, 1], [], []>} : vector<8x16xbf16>, vector<16x32xbf16>, vector<8x32xf32> -> vector<8x32xf32>
    %96 = arith.truncf %95 : vector<8x32xf32> to vector<8x32xbf16>
    %c1_63 = arith.constant 1 : index
    %c0_64 = arith.constant 0 : index
    %c0_65 = arith.constant 0 : index
    %97 = vector.load %arg10[%c1_63, %c0_64, %c0_65] : memref<4x32x128xbf16, #tpu.memory_space<vmem>>, vector<1x32x128xbf16>
    %98 = vector.shape_cast %97 : vector<1x32x128xbf16> to vector<32x128xbf16>
    %cst_66 = arith.constant dense<0.000000e+00> : vector<8x128xf32>
    %99 = tpu.matmul %96, %98, %cst_66 {dimension_numbers = #tpu.dot_dimension_numbers<[1], [0], [0], [1], [0, 0, 1, 1], [], []>} : vector<8x32xbf16>, vector<32x128xbf16>, vector<8x128xf32> -> vector<8x128xf32>
    %100 = arith.addf %54, %99 : vector<8x128xf32>
    %c2 = arith.constant 2 : index
    %c0_67 = arith.constant 0 : index
    %c0_68 = arith.constant 0 : index
    %101 = vector.load %arg4[%c2, %c0_67, %c0_68] : memref<4x128x32xbf16, #tpu.memory_space<vmem>>, vector<1x128x32xbf16>
    %102 = vector.shape_cast %101 : vector<1x128x32xbf16> to vector<128x32xbf16>
    %cst_69 = arith.constant dense<0.000000e+00> : vector<8x32xf32>
    %103 = tpu.matmul %6, %102, %cst_69 {dimension_numbers = #tpu.dot_dimension_numbers<[1], [0], [0], [1], [0, 0, 1, 1], [], []>} : vector<8x128xbf16>, vector<128x32xbf16>, vector<8x32xf32> -> vector<8x32xf32>
    %c2_70 = arith.constant 2 : index
    %c0_71 = arith.constant 0 : index
    %c0_72 = arith.constant 0 : index
    %104 = vector.load %arg5[%c2_70, %c0_71, %c0_72] : memref<4x1x32xf32, #tpu.memory_space<vmem>>, vector<1x1x32xf32>
    %105 = vector.shape_cast %104 : vector<1x1x32xf32> to vector<1x32xf32>
    %106 = vector.broadcast %105 : vector<1x32xf32> to vector<8x32xf32>
    %107 = arith.addf %103, %106 : vector<8x32xf32>
    %c2_73 = arith.constant 2 : index
    %c0_74 = arith.constant 0 : index
    %c0_75 = arith.constant 0 : index
    %108 = vector.load %arg6[%c2_73, %c0_74, %c0_75] : memref<4x128x32xbf16, #tpu.memory_space<vmem>>, vector<1x128x32xbf16>
    %109 = vector.shape_cast %108 : vector<1x128x32xbf16> to vector<128x32xbf16>
    %cst_76 = arith.constant dense<0.000000e+00> : vector<16x32xf32>
    %110 = tpu.matmul %7, %109, %cst_76 {dimension_numbers = #tpu.dot_dimension_numbers<[1], [0], [0], [1], [0, 0, 1, 1], [], []>} : vector<16x128xbf16>, vector<128x32xbf16>, vector<16x32xf32> -> vector<16x32xf32>
    %c2_77 = arith.constant 2 : index
    %c0_78 = arith.constant 0 : index
    %c0_79 = arith.constant 0 : index
    %111 = vector.load %arg7[%c2_77, %c0_78, %c0_79] : memref<4x1x32xf32, #tpu.memory_space<vmem>>, vector<1x1x32xf32>
    %112 = vector.shape_cast %111 : vector<1x1x32xf32> to vector<1x32xf32>
    %113 = vector.broadcast %112 : vector<1x32xf32> to vector<16x32xf32>
    %114 = arith.addf %110, %113 : vector<16x32xf32>
    %c2_80 = arith.constant 2 : index
    %c0_81 = arith.constant 0 : index
    %c0_82 = arith.constant 0 : index
    %115 = vector.load %arg8[%c2_80, %c0_81, %c0_82] : memref<4x128x32xbf16, #tpu.memory_space<vmem>>, vector<1x128x32xbf16>
    %116 = vector.shape_cast %115 : vector<1x128x32xbf16> to vector<128x32xbf16>
    %cst_83 = arith.constant dense<0.000000e+00> : vector<16x32xf32>
    %117 = tpu.matmul %7, %116, %cst_83 {dimension_numbers = #tpu.dot_dimension_numbers<[1], [0], [0], [1], [0, 0, 1, 1], [], []>} : vector<16x128xbf16>, vector<128x32xbf16>, vector<16x32xf32> -> vector<16x32xf32>
    %c2_84 = arith.constant 2 : index
    %c0_85 = arith.constant 0 : index
    %c0_86 = arith.constant 0 : index
    %118 = vector.load %arg9[%c2_84, %c0_85, %c0_86] : memref<4x1x32xf32, #tpu.memory_space<vmem>>, vector<1x1x32xf32>
    %119 = vector.shape_cast %118 : vector<1x1x32xf32> to vector<1x32xf32>
    %120 = vector.broadcast %119 : vector<1x32xf32> to vector<16x32xf32>
    %121 = arith.addf %117, %120 : vector<16x32xf32>
    %122 = arith.truncf %107 : vector<8x32xf32> to vector<8x32xbf16>
    %123 = arith.truncf %114 : vector<16x32xf32> to vector<16x32xbf16>
    %cst_87 = arith.constant dense<0.000000e+00> : vector<8x16xf32>
    %124 = tpu.matmul %122, %123, %cst_87 {dimension_numbers = #tpu.dot_dimension_numbers<[1], [1], [0], [0], [0, 0, 1, 0], [], []>} : vector<8x32xbf16>, vector<16x32xbf16>, vector<8x16xf32> -> vector<8x16xf32>
    %cst_88 = arith.constant 0.176776692 : f32
    %125 = vector.broadcast %cst_88 : f32 to vector<8x16xf32>
    %126 = arith.mulf %124, %125 : vector<8x16xf32>
    %127 = vector.broadcast %5 : vector<1x16xf32> to vector<8x16xf32>
    %128 = arith.addf %126, %127 : vector<8x16xf32>
    %cst_89 = arith.constant dense<0xFF800000> : vector<8xf32>
    %129 = vector.multi_reduction <maximumf>, %128, %cst_89 [1] : vector<8x16xf32> to vector<8xf32>
    %130 = vector.shape_cast %129 : vector<8xf32> to vector<8x1xf32>
    %131 = vector.broadcast %130 : vector<8x1xf32> to vector<8x16xf32>
    %132 = arith.subf %128, %131 : vector<8x16xf32>
    %133 = math.exp %132 : vector<8x16xf32>
    %cst_90 = arith.constant dense<0.000000e+00> : vector<8xf32>
    %134 = vector.multi_reduction <add>, %133, %cst_90 [1] : vector<8x16xf32> to vector<8xf32>
    %135 = vector.shape_cast %134 : vector<8xf32> to vector<8x1xf32>
    %136 = tpu.reciprocal %135 {approx = true} : vector<8x1xf32> -> vector<8x1xf32>
    %137 = vector.broadcast %136 : vector<8x1xf32> to vector<8x16xf32>
    %138 = arith.mulf %133, %137 : vector<8x16xf32>
    %139 = arith.truncf %138 : vector<8x16xf32> to vector<8x16xbf16>
    %140 = arith.truncf %121 : vector<16x32xf32> to vector<16x32xbf16>
    %cst_91 = arith.constant dense<0.000000e+00> : vector<8x32xf32>
    %141 = tpu.matmul %139, %140, %cst_91 {dimension_numbers = #tpu.dot_dimension_numbers<[1], [0], [0], [1], [0, 0, 1, 1], [], []>} : vector<8x16xbf16>, vector<16x32xbf16>, vector<8x32xf32> -> vector<8x32xf32>
    %142 = arith.truncf %141 : vector<8x32xf32> to vector<8x32xbf16>
    %c2_92 = arith.constant 2 : index
    %c0_93 = arith.constant 0 : index
    %c0_94 = arith.constant 0 : index
    %143 = vector.load %arg10[%c2_92, %c0_93, %c0_94] : memref<4x32x128xbf16, #tpu.memory_space<vmem>>, vector<1x32x128xbf16>
    %144 = vector.shape_cast %143 : vector<1x32x128xbf16> to vector<32x128xbf16>
    %cst_95 = arith.constant dense<0.000000e+00> : vector<8x128xf32>
    %145 = tpu.matmul %142, %144, %cst_95 {dimension_numbers = #tpu.dot_dimension_numbers<[1], [0], [0], [1], [0, 0, 1, 1], [], []>} : vector<8x32xbf16>, vector<32x128xbf16>, vector<8x128xf32> -> vector<8x128xf32>
    %146 = arith.addf %100, %145 : vector<8x128xf32>
    %c3 = arith.constant 3 : index
    %c0_96 = arith.constant 0 : index
    %c0_97 = arith.constant 0 : index
    %147 = vector.load %arg4[%c3, %c0_96, %c0_97] : memref<4x128x32xbf16, #tpu.memory_space<vmem>>, vector<1x128x32xbf16>
    %148 = vector.shape_cast %147 : vector<1x128x32xbf16> to vector<128x32xbf16>
    %cst_98 = arith.constant dense<0.000000e+00> : vector<8x32xf32>
    %149 = tpu.matmul %6, %148, %cst_98 {dimension_numbers = #tpu.dot_dimension_numbers<[1], [0], [0], [1], [0, 0, 1, 1], [], []>} : vector<8x128xbf16>, vector<128x32xbf16>, vector<8x32xf32> -> vector<8x32xf32>
    %c3_99 = arith.constant 3 : index
    %c0_100 = arith.constant 0 : index
    %c0_101 = arith.constant 0 : index
    %150 = vector.load %arg5[%c3_99, %c0_100, %c0_101] : memref<4x1x32xf32, #tpu.memory_space<vmem>>, vector<1x1x32xf32>
    %151 = vector.shape_cast %150 : vector<1x1x32xf32> to vector<1x32xf32>
    %152 = vector.broadcast %151 : vector<1x32xf32> to vector<8x32xf32>
    %153 = arith.addf %149, %152 : vector<8x32xf32>
    %c3_102 = arith.constant 3 : index
    %c0_103 = arith.constant 0 : index
    %c0_104 = arith.constant 0 : index
    %154 = vector.load %arg6[%c3_102, %c0_103, %c0_104] : memref<4x128x32xbf16, #tpu.memory_space<vmem>>, vector<1x128x32xbf16>
    %155 = vector.shape_cast %154 : vector<1x128x32xbf16> to vector<128x32xbf16>
    %cst_105 = arith.constant dense<0.000000e+00> : vector<16x32xf32>
    %156 = tpu.matmul %7, %155, %cst_105 {dimension_numbers = #tpu.dot_dimension_numbers<[1], [0], [0], [1], [0, 0, 1, 1], [], []>} : vector<16x128xbf16>, vector<128x32xbf16>, vector<16x32xf32> -> vector<16x32xf32>
    %c3_106 = arith.constant 3 : index
    %c0_107 = arith.constant 0 : index
    %c0_108 = arith.constant 0 : index
    %157 = vector.load %arg7[%c3_106, %c0_107, %c0_108] : memref<4x1x32xf32, #tpu.memory_space<vmem>>, vector<1x1x32xf32>
    %158 = vector.shape_cast %157 : vector<1x1x32xf32> to vector<1x32xf32>
    %159 = vector.broadcast %158 : vector<1x32xf32> to vector<16x32xf32>
    %160 = arith.addf %156, %159 : vector<16x32xf32>
    %c3_109 = arith.constant 3 : index
    %c0_110 = arith.constant 0 : index
    %c0_111 = arith.constant 0 : index
    %161 = vector.load %arg8[%c3_109, %c0_110, %c0_111] : memref<4x128x32xbf16, #tpu.memory_space<vmem>>, vector<1x128x32xbf16>
    %162 = vector.shape_cast %161 : vector<1x128x32xbf16> to vector<128x32xbf16>
    %cst_112 = arith.constant dense<0.000000e+00> : vector<16x32xf32>
    %163 = tpu.matmul %7, %162, %cst_112 {dimension_numbers = #tpu.dot_dimension_numbers<[1], [0], [0], [1], [0, 0, 1, 1], [], []>} : vector<16x128xbf16>, vector<128x32xbf16>, vector<16x32xf32> -> vector<16x32xf32>
    %c3_113 = arith.constant 3 : index
    %c0_114 = arith.constant 0 : index
    %c0_115 = arith.constant 0 : index
    %164 = vector.load %arg9[%c3_113, %c0_114, %c0_115] : memref<4x1x32xf32, #tpu.memory_space<vmem>>, vector<1x1x32xf32>
    %165 = vector.shape_cast %164 : vector<1x1x32xf32> to vector<1x32xf32>
    %166 = vector.broadcast %165 : vector<1x32xf32> to vector<16x32xf32>
    %167 = arith.addf %163, %166 : vector<16x32xf32>
    %168 = arith.truncf %153 : vector<8x32xf32> to vector<8x32xbf16>
    %169 = arith.truncf %160 : vector<16x32xf32> to vector<16x32xbf16>
    %cst_116 = arith.constant dense<0.000000e+00> : vector<8x16xf32>
    %170 = tpu.matmul %168, %169, %cst_116 {dimension_numbers = #tpu.dot_dimension_numbers<[1], [1], [0], [0], [0, 0, 1, 0], [], []>} : vector<8x32xbf16>, vector<16x32xbf16>, vector<8x16xf32> -> vector<8x16xf32>
    %cst_117 = arith.constant 0.176776692 : f32
    %171 = vector.broadcast %cst_117 : f32 to vector<8x16xf32>
    %172 = arith.mulf %170, %171 : vector<8x16xf32>
    %173 = vector.broadcast %5 : vector<1x16xf32> to vector<8x16xf32>
    %174 = arith.addf %172, %173 : vector<8x16xf32>
    %cst_118 = arith.constant dense<0xFF800000> : vector<8xf32>
    %175 = vector.multi_reduction <maximumf>, %174, %cst_118 [1] : vector<8x16xf32> to vector<8xf32>
    %176 = vector.shape_cast %175 : vector<8xf32> to vector<8x1xf32>
    %177 = vector.broadcast %176 : vector<8x1xf32> to vector<8x16xf32>
    %178 = arith.subf %174, %177 : vector<8x16xf32>
    %179 = math.exp %178 : vector<8x16xf32>
    %cst_119 = arith.constant dense<0.000000e+00> : vector<8xf32>
    %180 = vector.multi_reduction <add>, %179, %cst_119 [1] : vector<8x16xf32> to vector<8xf32>
    %181 = vector.shape_cast %180 : vector<8xf32> to vector<8x1xf32>
    %182 = tpu.reciprocal %181 {approx = true} : vector<8x1xf32> -> vector<8x1xf32>
    %183 = vector.broadcast %182 : vector<8x1xf32> to vector<8x16xf32>
    %184 = arith.mulf %179, %183 : vector<8x16xf32>
    %185 = arith.truncf %184 : vector<8x16xf32> to vector<8x16xbf16>
    %186 = arith.truncf %167 : vector<16x32xf32> to vector<16x32xbf16>
    %cst_120 = arith.constant dense<0.000000e+00> : vector<8x32xf32>
    %187 = tpu.matmul %185, %186, %cst_120 {dimension_numbers = #tpu.dot_dimension_numbers<[1], [0], [0], [1], [0, 0, 1, 1], [], []>} : vector<8x16xbf16>, vector<16x32xbf16>, vector<8x32xf32> -> vector<8x32xf32>
    %188 = arith.truncf %187 : vector<8x32xf32> to vector<8x32xbf16>
    %c3_121 = arith.constant 3 : index
    %c0_122 = arith.constant 0 : index
    %c0_123 = arith.constant 0 : index
    %189 = vector.load %arg10[%c3_121, %c0_122, %c0_123] : memref<4x32x128xbf16, #tpu.memory_space<vmem>>, vector<1x32x128xbf16>
    %190 = vector.shape_cast %189 : vector<1x32x128xbf16> to vector<32x128xbf16>
    %cst_124 = arith.constant dense<0.000000e+00> : vector<8x128xf32>
    %191 = tpu.matmul %188, %190, %cst_124 {dimension_numbers = #tpu.dot_dimension_numbers<[1], [0], [0], [1], [0, 0, 1, 1], [], []>} : vector<8x32xbf16>, vector<32x128xbf16>, vector<8x128xf32> -> vector<8x128xf32>
    %192 = arith.addf %146, %191 : vector<8x128xf32>
    %c0_125 = arith.constant 0 : index
    %c0_126 = arith.constant 0 : index
    %193 = vector.load %arg11[%c0_125, %c0_126] : memref<1x128xf32, #tpu.memory_space<vmem>>, vector<1x128xf32>
    %194 = vector.broadcast %193 : vector<1x128xf32> to vector<8x128xf32>
    %195 = arith.addf %192, %194 : vector<8x128xf32>
    %196 = arith.addf %195, %1 : vector<8x128xf32>
    %cst_127 = arith.constant dense<0.000000e+00> : vector<8xf32>
    %197 = vector.multi_reduction <add>, %196, %cst_127 [1] : vector<8x128xf32> to vector<8xf32>
    %198 = vector.shape_cast %197 : vector<8xf32> to vector<8x1xf32>
    %cst_128 = arith.constant 1.280000e+02 : f32
    %199 = vector.broadcast %cst_128 : f32 to vector<8x1xf32>
    %200 = arith.divf %198, %199 : vector<8x1xf32>
    %201 = vector.broadcast %200 : vector<8x1xf32> to vector<8x128xf32>
    %202 = arith.subf %196, %201 : vector<8x128xf32>
    %203 = arith.mulf %202, %202 : vector<8x128xf32>
    %cst_129 = arith.constant dense<0.000000e+00> : vector<8xf32>
    %204 = vector.multi_reduction <add>, %203, %cst_129 [1] : vector<8x128xf32> to vector<8xf32>
    %205 = vector.shape_cast %204 : vector<8xf32> to vector<8x1xf32>
    %cst_130 = arith.constant 1.280000e+02 : f32
    %206 = vector.broadcast %cst_130 : f32 to vector<8x1xf32>
    %207 = arith.divf %205, %206 : vector<8x1xf32>
    %208 = vector.broadcast %200 : vector<8x1xf32> to vector<8x128xf32>
    %209 = arith.subf %196, %208 : vector<8x128xf32>
    %cst_131 = arith.constant 9.99999996E-13 : f32
    %210 = vector.broadcast %cst_131 : f32 to vector<8x1xf32>
    %211 = arith.addf %207, %210 : vector<8x1xf32>
    %212 = math.rsqrt %211 : vector<8x1xf32>
    %213 = vector.broadcast %212 : vector<8x1xf32> to vector<8x128xf32>
    %214 = arith.mulf %209, %213 : vector<8x128xf32>
    %c0_132 = arith.constant 0 : index
    %c0_133 = arith.constant 0 : index
    %215 = vector.load %arg12[%c0_132, %c0_133] : memref<1x128xf32, #tpu.memory_space<vmem>>, vector<1x128xf32>
    %216 = vector.broadcast %215 : vector<1x128xf32> to vector<8x128xf32>
    %217 = arith.mulf %214, %216 : vector<8x128xf32>
    %c0_134 = arith.constant 0 : index
    %c0_135 = arith.constant 0 : index
    %218 = vector.load %arg13[%c0_134, %c0_135] : memref<1x128xf32, #tpu.memory_space<vmem>>, vector<1x128xf32>
    %219 = vector.broadcast %218 : vector<1x128xf32> to vector<8x128xf32>
    %220 = arith.addf %217, %219 : vector<8x128xf32>
    %c0_136 = arith.constant 0 : index
    %c0_137 = arith.constant 0 : index
    %c0_138 = arith.constant 0 : index
    %221 = vector.load %arg14[%c0_136, %c0_137, %c0_138] : memref<1x8x128xf32, #tpu.memory_space<vmem>>, vector<1x8x128xf32>
    %222 = vector.shape_cast %221 : vector<1x8x128xf32> to vector<8x128xf32>
    %223 = vector.shape_cast %220 : vector<8x128xf32> to vector<1x8x128xf32>
    tpu.vector_store %arg14[%c0_136, %c0_137, %c0_138], %223 {strides = array<i32>} : memref<1x8x128xf32, #tpu.memory_space<vmem>>, vector<1x8x128xf32>,
    return
  }
  func.func @transform_0(%arg0: i32) -> (i32, i32, i32) {
    %c0_i32 = arith.constant 0 : i32
    %c0_i32_0 = arith.constant 0 : i32
    %c0_i32_1 = arith.constant 0 : i32
    return %arg0, %c0_i32, %c0_i32_0 : i32, i32, i32
  }
  func.func @transform_1(%arg0: i32) -> (i32, i32, i32) {
    %c0_i32 = arith.constant 0 : i32
    %c0_i32_0 = arith.constant 0 : i32
    %c0_i32_1 = arith.constant 0 : i32
    return %arg0, %c0_i32, %c0_i32_0 : i32, i32, i32
  }
  func.func @transform_2(%arg0: i32) -> (i32, i32, i32) {
    %c0_i32 = arith.constant 0 : i32
    %c0_i32_0 = arith.constant 0 : i32
    %c0_i32_1 = arith.constant 0 : i32
    return %arg0, %c0_i32, %c0_i32_0 : i32, i32, i32
  }
  func.func @transform_3(%arg0: i32) -> (i32, i32, i32) {
    %c0_i32 = arith.constant 0 : i32
    %c0_i32_0 = arith.constant 0 : i32
    %c0_i32_1 = arith.constant 0 : i32
    %c0_i32_2 = arith.constant 0 : i32
    return %c0_i32, %c0_i32_0, %c0_i32_1 : i32, i32, i32
  }
  func.func @transform_4(%arg0: i32) -> (i32, i32, i32) {
    %c0_i32 = arith.constant 0 : i32
    %c0_i32_0 = arith.constant 0 : i32
    %c0_i32_1 = arith.constant 0 : i32
    %c0_i32_2 = arith.constant 0 : i32
    return %c0_i32, %c0_i32_0, %c0_i32_1 : i32, i32, i32
  }
  func.func @transform_5(%arg0: i32) -> (i32, i32, i32) {
    %c0_i32 = arith.constant 0 : i32
    %c0_i32_0 = arith.constant 0 : i32
    %c0_i32_1 = arith.constant 0 : i32
    %c0_i32_2 = arith.constant 0 : i32
    return %c0_i32, %c0_i32_0, %c0_i32_1 : i32, i32, i32
  }
  func.func @transform_6(%arg0: i32) -> (i32, i32, i32) {
    %c0_i32 = arith.constant 0 : i32
    %c0_i32_0 = arith.constant 0 : i32
    %c0_i32_1 = arith.constant 0 : i32
    %c0_i32_2 = arith.constant 0 : i32
    return %c0_i32, %c0_i32_0, %c0_i32_1 : i32, i32, i32
  }
  func.func @transform_7(%arg0: i32) -> (i32, i32, i32) {
    %c0_i32 = arith.constant 0 : i32
    %c0_i32_0 = arith.constant 0 : i32
    %c0_i32_1 = arith.constant 0 : i32
    %c0_i32_2 = arith.constant 0 : i32
    return %c0_i32, %c0_i32_0, %c0_i32_1 : i32, i32, i32
  }
  func.func @transform_8(%arg0: i32) -> (i32, i32, i32) {
    %c0_i32 = arith.constant 0 : i32
    %c0_i32_0 = arith.constant 0 : i32
    %c0_i32_1 = arith.constant 0 : i32
    %c0_i32_2 = arith.constant 0 : i32
    return %c0_i32, %c0_i32_0, %c0_i32_1 : i32, i32, i32
  }
  func.func @transform_9(%arg0: i32) -> (i32, i32, i32) {
    %c0_i32 = arith.constant 0 : i32
    %c0_i32_0 = arith.constant 0 : i32
    %c0_i32_1 = arith.constant 0 : i32
    %c0_i32_2 = arith.constant 0 : i32
    return %c0_i32, %c0_i32_0, %c0_i32_1 : i32, i32, i32
  }
  func.func @transform_10(%arg0: i32) -> (i32, i32) {
    %c0_i32 = arith.constant 0 : i32
    %c0_i32_0 = arith.constant 0 : i32
    %c0_i32_1 = arith.constant 0 : i32
    return %c0_i32, %c0_i32_0 : i32, i32
  }
  func.func @transform_11(%arg0: i32) -> (i32, i32) {
    %c0_i32 = arith.constant 0 : i32
    %c0_i32_0 = arith.constant 0 : i32
    %c0_i32_1 = arith.constant 0 : i32
    return %c0_i32, %c0_i32_0 : i32, i32
  }
  func.func @transform_12(%arg0: i32) -> (i32, i32) {
    %c0_i32 = arith.constant 0 : i32
    %c0_i32_0 = arith.constant 0 : i32
    %c0_i32_1 = arith.constant 0 : i32
    return %c0_i32, %c0_i32_0 : i32, i32
  }
  func.func @transform_13(%arg0: i32) -> (i32, i32, i32) {
    %c0_i32 = arith.constant 0 : i32
    %c0_i32_0 = arith.constant 0 : i32
    %c0_i32_1 = arith.constant 0 : i32
    return %arg0, %c0_i32, %c0_i32_0 : i32, i32, i32
  }
}

</mosaic_0001>

<llo_original>
// kernel: tpu_custom_call.1
$region0: #{tpu_custom_call.1}
  #allocation0 [shape = 'u32[]', space=smem, size = 0x4, offset = 0x4, fixed_abs, tag = 'smem constant byte address 0x4 - core index']
  #allocation1 [shape = 'u32[144,128]{1,0:T(1,128)}', space=vmem, size = 0x12000, scoped, tag = 'internal scratch']
  %s0 = inlined_call_operand.vmem [shape: f32[2,8,128], index: 0, kind: input, shape index: {}]
  %s1 = inlined_call_operand.vmem [shape: f32[2,16,128], index: 1, kind: input, shape index: {}]
  %s2 = inlined_call_operand.vmem [shape: f32[2,1,16], index: 2, kind: input, shape index: {}]
  %s3 = inlined_call_operand.vmem [shape: bf16[4,128,32], index: 3, kind: input, shape index: {}]
  %s4 = inlined_call_operand.vmem [shape: f32[4,1,32], index: 4, kind: input, shape index: {}]
  %s5 = inlined_call_operand.vmem [shape: bf16[4,128,32], index: 5, kind: input, shape index: {}]
  %s6 = inlined_call_operand.vmem [shape: f32[4,1,32], index: 6, kind: input, shape index: {}]
  %s7 = inlined_call_operand.vmem [shape: bf16[4,128,32], index: 7, kind: input, shape index: {}]
  %s8 = inlined_call_operand.vmem [shape: f32[4,1,32], index: 8, kind: input, shape index: {}]
  %s9 = inlined_call_operand.vmem [shape: bf16[4,32,128], index: 9, kind: input, shape index: {}]
  %s10 = inlined_call_operand.vmem [shape: f32[1,128], index: 10, kind: input, shape index: {}]
  %s11 = inlined_call_operand.vmem [shape: f32[1,128], index: 11, kind: input, shape index: {}]
  %s12 = inlined_call_operand.vmem [shape: f32[1,128], index: 12, kind: input, shape index: {}]
  %s13 = inlined_call_operand.hbm [shape: f32[2,8,128], index: 13, kind: output, shape index: {}]
  %s14 = sld [smem:[#allocation0]]
  $region85: #{tpu_custom_call.1} parent=0
    _
  %s16 = ssub.s32 1, %s14
  %s17 = scalar_select 0, %s16, %s14
  $region1: #{tpu_custom_call.1} parent=0
    #allocation2 [shape = 'u8[8192]{0}', space=vmem, size = 0x2000, scoped, tag = 'output window, operand 0']
    #allocation3 [shape = 's32[2]{0}', space=sflag, size = 0x8, scoped, tag = 'scoped memory for tpu_custom_call.1']
    %18 = vsyncpa [#allocation3], 0
    %s19 = scalar_lea.sflag [#allocation3], 1
    %20 = vsyncpa %s19, 0
    loop: start=0, step=1, limit=4
    $region2: #{tpu_custom_call.1} parent=1 // loop_pre_header
      _
    $region3: #{tpu_custom_call.1} parent=1 // loop_header
      %s22 = sphi 0, %s26
      %p23 = scmp.ge.s32.totalorder %s22, 4
      %s32 = sphi 0, %s34
      %s35 = sphi 0, %s32
      %s36 = sphi 0, %s35
      %s52 = sphi 0, %s36
      %s58 = sphi 0, %s60
      %s61 = sphi 0, %s58
      %s62 = sphi 0, %s61
      %s78 = sphi 0, %s62
      %s84 = sphi 0, %s86
      %s87 = sphi 0, %s84
      %s88 = sphi 0, %s87
      %s104 = sphi 0, %s88
      %s108 = sphi 0, %s108
      %s110 = sphi 0, %s108
      %s111 = sphi 0, %s110
      %s125 = sphi 0, %s111
      %s129 = sphi 0, %s129
      %s131 = sphi 0, %s129
      %s132 = sphi 0, %s131
      %s146 = sphi 0, %s132
      %s150 = sphi 0, %s150
      %s152 = sphi 0, %s150
      %s153 = sphi 0, %s152
      %s167 = sphi 0, %s153
      %s171 = sphi 0, %s171
      %s173 = sphi 0, %s171
      %s174 = sphi 0, %s173
      %s188 = sphi 0, %s174
      %s192 = sphi 0, %s192
      %s194 = sphi 0, %s192
      %s195 = sphi 0, %s194
      %s209 = sphi 0, %s195
      %s213 = sphi 0, %s213
      %s215 = sphi 0, %s213
      %s216 = sphi 0, %s215
      %s230 = sphi 0, %s216
      %s234 = sphi 0, %s234
      %s236 = sphi 0, %s234
      %s237 = sphi 0, %s236
      %s251 = sphi 0, %s237
      %s255 = sphi 0, %s255
      %s257 = sphi 0, %s255
      %s258 = sphi 0, %s257
      %s272 = sphi 0, %s258
      %s276 = sphi 0, %s276
      %s278 = sphi 0, %s276
      %s279 = sphi 0, %s278
      %s293 = sphi 0, %s279
      %s297 = sphi 0, %s297
      %s299 = sphi 0, %s297
      %s300 = sphi 0, %s299
      %s314 = sphi 0, %s300
      %s320 = sphi 0, %s322
      %s323 = sphi 0, %s320
      %s324 = sphi 0, %s323
      %s340 = sphi 0, %s324
    $region4: #{tpu_custom_call.1} parent=1 // loop_header_branch
      %25 = sbr.rel (%p23) target = $region8
    $region5: #{tpu_custom_call.1} parent=1 // loop_body
      %s27 = ssub.s32 %s22, 1
      %s28 = ssub.s32 %s22, 2
      %s29 = sadd.s32 %s22, 1
      %s30 = ssub.s32 %s22, %s29
      %p31 = scmp.eq.s32.totalorder %s30, 0
      %s33 = sadd.s32 %s32, 1
      %s34 = scalar_select %p31, %s32, %s33
      %p37 = pneg %p31
      %p38 = scmp.eq.s32.totalorder %s22, 1
      %p39 = por %p37, %p38
      %p40 = scmp.ne.s32.totalorder %s32, %s35
      %p41 = scmp.eq.s32.totalorder %s22, 0
      %p42 = por %p40, %p41
      %p43 = scmp.ne.s32.totalorder %s32, %s35
      %p44 = scmp.eq.s32.totalorder %s27, 1
      %p45 = por %p43, %p44
      %p46 = scmp.ne.s32.totalorder %s35, %s36
      %p47 = scmp.eq.s32.totalorder %s27, 0
      %p48 = por %p46, %p47
      %p49 = scmp.ne.s32.totalorder %s35, %s36
      %p50 = scmp.eq.s32.totalorder %s28, 1
      %p51 = por %p49, %p50
      %p53 = scmp.ne.s32.totalorder %s36, %s52
      %p54 = scmp.eq.s32.totalorder %s28, 0
      %p55 = por %p53, %p54
      %s56 = ssub.s32 %s22, %s29
      %p57 = scmp.eq.s32.totalorder %s56, 0
      %s59 = sadd.s32 %s58, 1
      %s60 = scalar_select %p57, %s58, %s59
      %p63 = pneg %p57
      %p64 = scmp.eq.s32.totalorder %s22, 1
      %p65 = por %p63, %p64
      %p66 = scmp.ne.s32.totalorder %s58, %s61
      %p67 = scmp.eq.s32.totalorder %s22, 0
      %p68 = por %p66, %p67
      %p69 = scmp.ne.s32.totalorder %s58, %s61
      %p70 = scmp.eq.s32.totalorder %s27, 1
      %p71 = por %p69, %p70
      %p72 = scmp.ne.s32.totalorder %s61, %s62
      %p73 = scmp.eq.s32.totalorder %s27, 0
      %p74 = por %p72, %p73
      %p75 = scmp.ne.s32.totalorder %s61, %s62
      %p76 = scmp.eq.s32.totalorder %s28, 1
      %p77 = por %p75, %p76
      %p79 = scmp.ne.s32.totalorder %s62, %s78
      %p80 = scmp.eq.s32.totalorder %s28, 0
      %p81 = por %p79, %p80
      %s82 = ssub.s32 %s22, %s29
      %p83 = scmp.eq.s32.totalorder %s82, 0
      %s85 = sadd.s32 %s84, 1
      %s86 = scalar_select %p83, %s84, %s85
      %p89 = pneg %p83
      %p90 = scmp.eq.s32.totalorder %s22, 1
      %p91 = por %p89, %p90
      %p92 = scmp.ne.s32.totalorder %s84, %s87
      %p93 = scmp.eq.s32.totalorder %s22, 0
      %p94 = por %p92, %p93
      %p95 = scmp.ne.s32.totalorder %s84, %s87
      %p96 = scmp.eq.s32.totalorder %s27, 1
      %p97 = por %p95, %p96
      %p98 = scmp.ne.s32.totalorder %s87, %s88
      %p99 = scmp.eq.s32.totalorder %s27, 0
      %p100 = por %p98, %p99
      %p101 = scmp.ne.s32.totalorder %s87, %s88
      %p102 = scmp.eq.s32.totalorder %s28, 1
      %p103 = por %p101, %p102
      %p105 = scmp.ne.s32.totalorder %s88, %s104
      %p106 = scmp.eq.s32.totalorder %s28, 0
      %p107 = por %p105, %p106
      %s109 = sadd.s32 %s108, 1
      %p112 = scmp.eq.s32.totalorder %s22, 1
      %p113 = scmp.ne.s32.totalorder %s108, %s110
      %p114 = scmp.eq.s32.totalorder %s22, 0
      %p115 = por %p113, %p114
      %p116 = scmp.ne.s32.totalorder %s108, %s110
      %p117 = scmp.eq.s32.totalorder %s27, 1
      %p118 = por %p116, %p117
      %p119 = scmp.ne.s32.totalorder %s110, %s111
      %p120 = scmp.eq.s32.totalorder %s27, 0
      %p121 = por %p119, %p120
      %p122 = scmp.ne.s32.totalorder %s110, %s111
      %p123 = scmp.eq.s32.totalorder %s28, 1
      %p124 = por %p122, %p123
      %p126 = scmp.ne.s32.totalorder %s111, %s125
      %p127 = scmp.eq.s32.totalorder %s28, 0
      %p128 = por %p126, %p127
      %s130 = sadd.s32 %s129, 1
      %p133 = scmp.eq.s32.totalorder %s22, 1
      %p134 = scmp.ne.s32.totalorder %s129, %s131
      %p135 = scmp.eq.s32.totalorder %s22, 0
      %p136 = por %p134, %p135
      %p137 = scmp.ne.s32.totalorder %s129, %s131
      %p138 = scmp.eq.s32.totalorder %s27, 1
      %p139 = por %p137, %p138
      %p140 = scmp.ne.s32.totalorder %s131, %s132
      %p141 = scmp.eq.s32.totalorder %s27, 0
      %p142 = por %p140, %p141
      %p143 = scmp.ne.s32.totalorder %s131, %s132
      %p144 = scmp.eq.s32.totalorder %s28, 1
      %p145 = por %p143, %p144
      %p147 = scmp.ne.s32.totalorder %s132, %s146
      %p148 = scmp.eq.s32.totalorder %s28, 0
      %p149 = por %p147, %p148
      %s151 = sadd.s32 %s150, 1
      %p154 = scmp.eq.s32.totalorder %s22, 1
      %p155 = scmp.ne.s32.totalorder %s150, %s152
      %p156 = scmp.eq.s32.totalorder %s22, 0
      %p157 = por %p155, %p156
      %p158 = scmp.ne.s32.totalorder %s150, %s152
      %p159 = scmp.eq.s32.totalorder %s27, 1
      %p160 = por %p158, %p159
      %p161 = scmp.ne.s32.totalorder %s152, %s153
      %p162 = scmp.eq.s32.totalorder %s27, 0
      %p163 = por %p161, %p162
      %p164 = scmp.ne.s32.totalorder %s152, %s153
      %p165 = scmp.eq.s32.totalorder %s28, 1
      %p166 = por %p164, %p165
      %p168 = scmp.ne.s32.totalorder %s153, %s167
      %p169 = scmp.eq.s32.totalorder %s28, 0
      %p170 = por %p168, %p169
      %s172 = sadd.s32 %s171, 1
      %p175 = scmp.eq.s32.totalorder %s22, 1
      %p176 = scmp.ne.s32.totalorder %s171, %s173
      %p177 = scmp.eq.s32.totalorder %s22, 0
      %p178 = por %p176, %p177
      %p179 = scmp.ne.s32.totalorder %s171, %s173
      %p180 = scmp.eq.s32.totalorder %s27, 1
      %p181 = por %p179, %p180
      %p182 = scmp.ne.s32.totalorder %s173, %s174
      %p183 = scmp.eq.s32.totalorder %s27, 0
      %p184 = por %p182, %p183
      %p185 = scmp.ne.s32.totalorder %s173, %s174
      %p186 = scmp.eq.s32.totalorder %s28, 1
      %p187 = por %p185, %p186
      %p189 = scmp.ne.s32.totalorder %s174, %s188
      %p190 = scmp.eq.s32.totalorder %s28, 0
      %p191 = por %p189, %p190
      %s193 = sadd.s32 %s192, 1
      %p196 = scmp.eq.s32.totalorder %s22, 1
      %p197 = scmp.ne.s32.totalorder %s192, %s194
      %p198 = scmp.eq.s32.totalorder %s22, 0
      %p199 = por %p197, %p198
      %p200 = scmp.ne.s32.totalorder %s192, %s194
      %p201 = scmp.eq.s32.totalorder %s27, 1
      %p202 = por %p200, %p201
      %p203 = scmp.ne.s32.totalorder %s194, %s195
      %p204 = scmp.eq.s32.totalorder %s27, 0
      %p205 = por %p203, %p204
      %p206 = scmp.ne.s32.totalorder %s194, %s195
      %p207 = scmp.eq.s32.totalorder %s28, 1
      %p208 = por %p206, %p207
      %p210 = scmp.ne.s32.totalorder %s195, %s209
      %p211 = scmp.eq.s32.totalorder %s28, 0
      %p212 = por %p210, %p211
      %s214 = sadd.s32 %s213, 1
      %p217 = scmp.eq.s32.totalorder %s22, 1
      %p218 = scmp.ne.s32.totalorder %s213, %s215
      %p219 = scmp.eq.s32.totalorder %s22, 0
      %p220 = por %p218, %p219
      %p221 = scmp.ne.s32.totalorder %s213, %s215
      %p222 = scmp.eq.s32.totalorder %s27, 1
      %p223 = por %p221, %p222
      %p224 = scmp.ne.s32.totalorder %s215, %s216
      %p225 = scmp.eq.s32.totalorder %s27, 0
      %p226 = por %p224, %p225
      %p227 = scmp.ne.s32.totalorder %s215, %s216
      %p228 = scmp.eq.s32.totalorder %s28, 1
      %p229 = por %p227, %p228
      %p231 = scmp.ne.s32.totalorder %s216, %s230
      %p232 = scmp.eq.s32.totalorder %s28, 0
      %p233 = por %p231, %p232
      %s235 = sadd.s32 %s234, 1
      %p238 = scmp.eq.s32.totalorder %s22, 1
      %p239 = scmp.ne.s32.totalorder %s234, %s236
      %p240 = scmp.eq.s32.totalorder %s22, 0
      %p241 = por %p239, %p240
      %p242 = scmp.ne.s32.totalorder %s234, %s236
      %p243 = scmp.eq.s32.totalorder %s27, 1
      %p244 = por %p242, %p243
      %p245 = scmp.ne.s32.totalorder %s236, %s237
      %p246 = scmp.eq.s32.totalorder %s27, 0
      %p247 = por %p245, %p246
      %p248 = scmp.ne.s32.totalorder %s236, %s237
      %p249 = scmp.eq.s32.totalorder %s28, 1
      %p250 = por %p248, %p249
      %p252 = scmp.ne.s32.totalorder %s237, %s251
      %p253 = scmp.eq.s32.totalorder %s28, 0
      %p254 = por %p252, %p253
      %s256 = sadd.s32 %s255, 1
      %p259 = scmp.eq.s32.totalorder %s22, 1
      %p260 = scmp.ne.s32.totalorder %s255, %s257
      %p261 = scmp.eq.s32.totalorder %s22, 0
      %p262 = por %p260, %p261
      %p263 = scmp.ne.s32.totalorder %s255, %s257
      %p264 = scmp.eq.s32.totalorder %s27, 1
      %p265 = por %p263, %p264
      %p266 = scmp.ne.s32.totalorder %s257, %s258
      %p267 = scmp.eq.s32.totalorder %s27, 0
      %p268 = por %p266, %p267
      %p269 = scmp.ne.s32.totalorder %s257, %s258
      %p270 = scmp.eq.s32.totalorder %s28, 1
      %p271 = por %p269, %p270
      %p273 = scmp.ne.s32.totalorder %s258, %s272
      %p274 = scmp.eq.s32.totalorder %s28, 0
      %p275 = por %p273, %p274
      %s277 = sadd.s32 %s276, 1
      %p280 = scmp.eq.s32.totalorder %s22, 1
      %p281 = scmp.ne.s32.totalorder %s276, %s278
      %p282 = scmp.eq.s32.totalorder %s22, 0
      %p283 = por %p281, %p282
      %p284 = scmp.ne.s32.totalorder %s276, %s278
      %p285 = scmp.eq.s32.totalorder %s27, 1
      %p286 = por %p284, %p285
      %p287 = scmp.ne.s32.totalorder %s278, %s279
      %p288 = scmp.eq.s32.totalorder %s27, 0
      %p289 = por %p287, %p288
      %p290 = scmp.ne.s32.totalorder %s278, %s279
      %p291 = scmp.eq.s32.totalorder %s28, 1
      %p292 = por %p290, %p291
      %p294 = scmp.ne.s32.totalorder %s279, %s293
      %p295 = scmp.eq.s32.totalorder %s28, 0
      %p296 = por %p294, %p295
      %s298 = sadd.s32 %s297, 1
      %p301 = scmp.eq.s32.totalorder %s22, 1
      %p302 = scmp.ne.s32.totalorder %s297, %s299
      %p303 = scmp.eq.s32.totalorder %s22, 0
      %p304 = por %p302, %p303
      %p305 = scmp.ne.s32.totalorder %s297, %s299
      %p306 = scmp.eq.s32.totalorder %s27, 1
      %p307 = por %p305, %p306
      %p308 = scmp.ne.s32.totalorder %s299, %s300
      %p309 = scmp.eq.s32.totalorder %s27, 0
      %p310 = por %p308, %p309
      %p311 = scmp.ne.s32.totalorder %s299, %s300
      %p312 = scmp.eq.s32.totalorder %s28, 1
      %p313 = por %p311, %p312
      %p315 = scmp.ne.s32.totalorder %s300, %s314
      %p316 = scmp.eq.s32.totalorder %s28, 0
      %p317 = por %p315, %p316
      %s318 = ssub.s32 %s22, %s29
      %p319 = scmp.eq.s32.totalorder %s318, 0
      %s321 = sadd.s32 %s320, 1
      %s322 = scalar_select %p319, %s320, %s321
      %p325 = pneg %p319
      %p326 = scmp.eq.s32.totalorder %s22, 1
      %p327 = por %p325, %p326
      %p328 = scmp.ne.s32.totalorder %s320, %s323
      %p329 = scmp.eq.s32.totalorder %s22, 0
      %p330 = por %p328, %p329
      %p331 = scmp.ne.s32.totalorder %s320, %s323
      %p332 = scmp.eq.s32.totalorder %s27, 1
      %p333 = por %p331, %p332
      %p334 = scmp.ne.s32.totalorder %s323, %s324
      %p335 = scmp.eq.s32.totalorder %s27, 0
      %p336 = por %p334, %p335
      %p337 = scmp.ne.s32.totalorder %s323, %s324
      %p338 = scmp.eq.s32.totalorder %s28, 1
      %p339 = por %p337, %p338
      %p341 = scmp.ne.s32.totalorder %s324, %s340
      %p342 = scmp.eq.s32.totalorder %s28, 0
      %p343 = por %p341, %p342
      %p344 = scmp.le.s32.totalorder 1, %s22
      %p345 = scmp.lt.s32.totalorder %s22, 3
      %p346 = pnand %p344, %p345
      %p347 = pneg %p346
      // Predicated region
      $region9: #{tpu_custom_call.1} parent=5 // pred_check
        _
      $region10: #{tpu_custom_call.1} parent=5 // pred_check_branch
        %349 = sbr.rel (%p346) target = $region12
      $region11: #{tpu_custom_call.1} parent=5 // pred_region
        %s350 = ssub.s32 %s22, 1
        // Predicated region
        $region13: #{tpu_custom_call.1} parent=11 // pred_check
          %p351 = pneg %p121
        $region14: #{tpu_custom_call.1} parent=11 // pred_check_branch
          %353 = sbr.rel (%p351) target = $region16
        $region15: #{tpu_custom_call.1} parent=11 // pred_region
          _
        $region16: #{tpu_custom_call.1} parent=11 // pred_fallthru
          _
        // Predicated region
        $region17: #{tpu_custom_call.1} parent=11 // pred_check
          %p354 = pneg %p142
        $region18: #{tpu_custom_call.1} parent=11 // pred_check_branch
          %356 = sbr.rel (%p354) target = $region20
        $region19: #{tpu_custom_call.1} parent=11 // pred_region
          _
        $region20: #{tpu_custom_call.1} parent=11 // pred_fallthru
          _
        // Predicated region
        $region21: #{tpu_custom_call.1} parent=11 // pred_check
          %p357 = pneg %p163
        $region22: #{tpu_custom_call.1} parent=11 // pred_check_branch
          %359 = sbr.rel (%p357) target = $region24
        $region23: #{tpu_custom_call.1} parent=11 // pred_region
          _
        $region24: #{tpu_custom_call.1} parent=11 // pred_fallthru
          _
        // Predicated region
        $region25: #{tpu_custom_call.1} parent=11 // pred_check
          %p360 = pneg %p184
        $region26: #{tpu_custom_call.1} parent=11 // pred_check_branch
          %362 = sbr.rel (%p360) target = $region28
        $region27: #{tpu_custom_call.1} parent=11 // pred_region
          _
        $region28: #{tpu_custom_call.1} parent=11 // pred_fallthru
          _
        // Predicated region
        $region29: #{tpu_custom_call.1} parent=11 // pred_check
          %p363 = pneg %p205
        $region30: #{tpu_custom_call.1} parent=11 // pred_check_branch
          %365 = sbr.rel (%p363) target = $region32
        $region31: #{tpu_custom_call.1} parent=11 // pred_region
          _
        $region32: #{tpu_custom_call.1} parent=11 // pred_fallthru
          _
        // Predicated region
        $region33: #{tpu_custom_call.1} parent=11 // pred_check
          %p366 = pneg %p226
        $region34: #{tpu_custom_call.1} parent=11 // pred_check_branch
          %368 = sbr.rel (%p366) target = $region36
        $region35: #{tpu_custom_call.1} parent=11 // pred_region
          _
        $region36: #{tpu_custom_call.1} parent=11 // pred_fallthru
          _
        // Predicated region
        $region37: #{tpu_custom_call.1} parent=11 // pred_check
          %p369 = pneg %p247
        $region38: #{tpu_custom_call.1} parent=11 // pred_check_branch
          %371 = sbr.rel (%p369) target = $region40
        $region39: #{tpu_custom_call.1} parent=11 // pred_region
          _
        $region40: #{tpu_custom_call.1} parent=11 // pred_fallthru
          _
        // Predicated region
        $region41: #{tpu_custom_call.1} parent=11 // pred_check
          %p372 = pneg %p268
        $region42: #{tpu_custom_call.1} parent=11 // pred_check_branch
          %374 = sbr.rel (%p372) target = $region44
        $region43: #{tpu_custom_call.1} parent=11 // pred_region
          _
        $region44: #{tpu_custom_call.1} parent=11 // pred_fallthru
          _
        // Predicated region
        $region45: #{tpu_custom_call.1} parent=11 // pred_check
          %p375 = pneg %p289
        $region46: #{tpu_custom_call.1} parent=11 // pred_check_branch
          %377 = sbr.rel (%p375) target = $region48
        $region47: #{tpu_custom_call.1} parent=11 // pred_region
          _
        $region48: #{tpu_custom_call.1} parent=11 // pred_fallthru
          _
        // Predicated region
        $region49: #{tpu_custom_call.1} parent=11 // pred_check
          %p378 = pneg %p310
        $region50: #{tpu_custom_call.1} parent=11 // pred_check_branch
          %380 = sbr.rel (%p378) target = $region52
        $region51: #{tpu_custom_call.1} parent=11 // pred_region
          _
        $region52: #{tpu_custom_call.1} parent=11 // pred_fallthru
          _
      $region12: #{tpu_custom_call.1} parent=5 // pred_fallthru
        _
      %p381 = scmp.lt.s32.totalorder %s22, 2
      // Predicated region
      $region53: #{tpu_custom_call.1} parent=5 // pred_check
        %p382 = pneg %p381
      $region54: #{tpu_custom_call.1} parent=5 // pred_check_branch
        %384 = sbr.rel (%p382) target = $region56
      $region55: #{tpu_custom_call.1} parent=5 // pred_region
        // Predicated region
        $region57: #{tpu_custom_call.1} parent=55 // pred_check
          %p385 = pneg %p42
        $region58: #{tpu_custom_call.1} parent=55 // pred_check_branch
          %387 = sbr.rel (%p385) target = $region60
        $region59: #{tpu_custom_call.1} parent=55 // pred_region
          %p388 = scmp.lt.s32.totalorder %s22, 1
          %s389 = scalar_select %p388, %s22, 1
          %s390 = smul.addr %s389, 8
          %s391 = scalar_lea.vmem %s0, %s390
        $region60: #{tpu_custom_call.1} parent=55 // pred_fallthru
          _
        // Predicated region
        $region61: #{tpu_custom_call.1} parent=55 // pred_check
          %p392 = pneg %p68
        $region62: #{tpu_custom_call.1} parent=55 // pred_check_branch
          %394 = sbr.rel (%p392) target = $region64
        $region63: #{tpu_custom_call.1} parent=55 // pred_region
          %p395 = scmp.lt.s32.totalorder %s22, 1
          %s396 = scalar_select %p395, %s22, 1
          %s397 = smul.addr %s396, 2
          %s398 = smul.addr %s397, 8
          %s399 = scalar_lea.vmem %s1, %s398
        $region64: #{tpu_custom_call.1} parent=55 // pred_fallthru
          _
        // Predicated region
        $region65: #{tpu_custom_call.1} parent=55 // pred_check
          %p400 = pneg %p94
        $region66: #{tpu_custom_call.1} parent=55 // pred_check_branch
          %402 = sbr.rel (%p400) target = $region68
        $region67: #{tpu_custom_call.1} parent=55 // pred_region
          %p403 = scmp.lt.s32.totalorder %s22, 1
          %s404 = scalar_select %p403, %s22, 1
          %s405 = scalar_lea.vmem %s2, %s404
        $region68: #{tpu_custom_call.1} parent=55 // pred_fallthru
          _
      $region56: #{tpu_custom_call.1} parent=5 // pred_fallthru
        _
      %p406 = scmp.le.s32.totalorder 1, %s22
      %p407 = scmp.lt.s32.totalorder %s22, 3
      %p408 = pnand %p406, %p407
      %p409 = pneg %p408
      // Predicated region
      $region69: #{tpu_custom_call.1} parent=5 // pred_check
        _
      $region70: #{tpu_custom_call.1} parent=5 // pred_check_branch
        %411 = sbr.rel (%p408) target = $region72
      $region71: #{tpu_custom_call.1} parent=5 // pred_region
        %s412 = ssub.s32 %s22, 1
        %p413 = scmp.lt.s32.totalorder %s27, 1
        %s414 = scalar_select %p413, %s27, 1
        %s415 = smul.addr %s414, 8
        %s416 = scalar_lea.vmem %s0, %s415
        %p417 = pneg %p48
        %p418 = pneg %p45
        %p419 = scmp.lt.s32.totalorder %s27, 1
        %s420 = scalar_select %p419, %s27, 1
        %s421 = smul.addr %s420, 2
        %s422 = smul.addr %s421, 8
        %s423 = scalar_lea.vmem %s1, %s422
        %p424 = pneg %p74
        %p425 = pneg %p71
        %p426 = scmp.lt.s32.totalorder %s27, 1
        %s427 = scalar_select %p426, %s27, 1
        %s428 = scalar_lea.vmem %s2, %s427
        %p429 = pneg %p100
        %p430 = pneg %p97
        %p431 = pneg %p121
        %p432 = pneg %p118
        %p433 = pneg %p142
        %p434 = pneg %p139
        %p435 = pneg %p163
        %p436 = pneg %p160
        %p437 = pneg %p184
        %p438 = pneg %p181
        %p439 = pneg %p205
        %p440 = pneg %p202
        %p441 = pneg %p226
        %p442 = pneg %p223
        %p443 = pneg %p247
        %p444 = pneg %p244
        %p445 = pneg %p268
        %p446 = pneg %p265
        %p447 = pneg %p289
        %p448 = pneg %p286
        %p449 = pneg %p310
        %p450 = pneg %p307
        %p451 = pneg %p336
        %p452 = pneg %p333
        %s453 = sand.u32 %s323, 1
        %s454 = scalar_lea.sflag [#allocation3], %s453
        %s455 = sand.u32 %s323, 1
        %s456 = smul.addr %s455, 8
        %s457 = scalar_lea.vmem [#allocation2], %s456
        %p458 = scmp.lt.s32.totalorder %s27, 1
        %s459 = scalar_select %p458, %s27, 1
        %s460 = smul.addr %s459, 8
        %s461 = scalar_lea.vmem %s0, %s460
        %p462 = scmp.lt.s32.totalorder %s27, 1
        %s463 = scalar_select %p462, %s27, 1
        %s464 = smul.addr %s463, 2
        %s465 = smul.addr %s464, 8
        %s466 = scalar_lea.vmem %s1, %s465
        %p467 = scmp.lt.s32.totalorder %s27, 1
        %s468 = scalar_select %p467, %s27, 1
        %s469 = scalar_lea.vmem %s2, %s468
        %v471 = vld [vmem:[%s461] sm:$0xff]
        %v472 = vld [vmem:[%s466] sm:$0xff]
        %v473 = vld [vmem:[%s466 + $0x8] sm:$0xff]
        %v474 = vld [vmem:[%s469] sm:$0x1]
        %v475 = vpack.c.bf16 %v471, %v471
        %v476 = vpack.c.bf16 %v473, %v472
        %v477 = vld [vmem:[%s3] sm:$0xf]
        %v478 = vld [vmem:[%s3 + $0x4] sm:$0xf]
        %v479 = vld [vmem:[%s3 + $0x8] sm:$0xf]
        %v480 = vld [vmem:[%s3 + $0xc] sm:$0xf]
        %v481 = vld [vmem:[%s3 + $0x10] sm:$0xf]
        %v482 = vld [vmem:[%s3 + $0x14] sm:$0xf]
        %v483 = vld [vmem:[%s3 + $0x18] sm:$0xf]
        %v484 = vld [vmem:[%s3 + $0x1c] sm:$0xf]
        %v485 = vld [vmem:[%s3 + $0x20] sm:$0xf]
        %v486 = vld [vmem:[%s3 + $0x24] sm:$0xf]
        %v487 = vld [vmem:[%s3 + $0x28] sm:$0xf]
        %v488 = vld [vmem:[%s3 + $0x2c] sm:$0xf]
        %v489 = vld [vmem:[%s3 + $0x30] sm:$0xf]
        %v490 = vld [vmem:[%s3 + $0x34] sm:$0xf]
        %v491 = vld [vmem:[%s3 + $0x38] sm:$0xf]
        %v492 = vld [vmem:[%s3 + $0x3c] sm:$0xf]
        %v493 = vld [vmem:[%s4] sm:$0x1]
        %v495 = vlaneseq
        %v496 = vshrl.u32 %v495, 7
        %v497 = vsub.s32 0, %v496
        %v498 = vrot.slane %v493, %v497
        %v516 = vunpack.c.l.b16 %v477
        %v517 = vunpack.c.l.b16 %v478
        %v518 = vunpack.c.l.b16 %v479
        %v519 = vunpack.c.l.b16 %v480
        %v520 = vunpack.c.l.b16 %v481
        %v521 = vunpack.c.l.b16 %v482
        %v522 = vunpack.c.l.b16 %v483
        %v523 = vunpack.c.l.b16 %v484
        %v524 = vunpack.c.l.b16 %v485
        %v525 = vunpack.c.l.b16 %v486
        %v526 = vunpack.c.l.b16 %v487
        %v527 = vunpack.c.l.b16 %v488
        %v528 = vunpack.c.l.b16 %v489
        %v529 = vunpack.c.l.b16 %v490
        %v530 = vunpack.c.l.b16 %v491
        %v531 = vunpack.c.l.b16 %v492
        %v532 = vpack.c.b16 %v517, %v516
        %v533 = vpack.c.b16 %v519, %v518
        %v534 = vpack.c.b16 %v521, %v520
        %v535 = vpack.c.b16 %v523, %v522
        %v536 = vpack.c.b16 %v525, %v524
        %v537 = vpack.c.b16 %v527, %v526
        %v538 = vpack.c.b16 %v529, %v528
        %v539 = vpack.c.b16 %v531, %v530
        %548 = vmatprep.subr.bf16.mxu0 0
        %549 = vmatpush1.bf16.msra.mxu0 %v532
        %550 = vmatprep.subr.bf16.mxu0 0
        %551 = vmatpush1.bf16.msra.mxu0 %v533
        %552 = vmatprep.subr.bf16.mxu0 0
        %553 = vmatpush1.bf16.msra.mxu0 %v534
        %554 = vmatprep.subr.bf16.mxu0 0
        %555 = vmatpush1.bf16.msra.mxu0 %v535
        %556 = vmatprep.subr.bf16.mxu0 0
        %557 = vmatpush1.bf16.msra.mxu0 %v536
        %558 = vmatprep.subr.bf16.mxu0 0
        %559 = vmatpush1.bf16.msra.mxu0 %v537
        %560 = vmatprep.subr.bf16.mxu0 0
        %561 = vmatpush1.bf16.msra.mxu0 %v538
        %562 = vmatprep.subr.bf16.mxu0 0
        %563 = vmatpush1.bf16.msra.mxu0 %v539
        %564 = vmatprep.subr.bf16.mxu0 0
        %565 = vmatpush1.bf16.msra.mxu0 0
        %566 = vmatprep.subr.bf16.mxu0 0
        %567 = vmatpush1.bf16.msra.mxu0 0
        %568 = vmatprep.subr.bf16.mxu0 0
        %569 = vmatpush1.bf16.msra.mxu0 0
        %570 = vmatprep.subr.bf16.mxu0 0
        %571 = vmatpush1.bf16.msra.mxu0 0
        %572 = vmatprep.subr.bf16.mxu0 0
        %573 = vmatpush1.bf16.msra.mxu0 0
        %574 = vmatprep.subr.bf16.mxu0 0
        %575 = vmatpush1.bf16.msra.mxu0 0
        %576 = vmatprep.subr.bf16.mxu0 0
        %577 = vmatpush1.bf16.msra.mxu0 0
        %578 = vmatprep.subr.bf16.mxu0 0
        %579 = vmatpush1.bf16.msra.mxu0 0
        %580 = vmatprep.mubr.bf16.mxu0 0
        %581 = vmatmul.mubr.bf16.gmra.mrb[0].mxu0 %v475
        %v582 = vpop.f32.mrb[0].mxu0
        %v583 = vadd.f32 %v498, %v582
        %v584 = vpop.f32.mrb[0].mxu0
        %v585 = vpop.f32.mrb[0].mxu0
        %v586 = vpop.f32.mrb[0].mxu0
        %587 = vdwg.mxu0
        %v588 = vld [vmem:[%s5] sm:$0xf]
        %v589 = vld [vmem:[%s5 + $0x4] sm:$0xf]
        %v590 = vld [vmem:[%s5 + $0x8] sm:$0xf]
        %v591 = vld [vmem:[%s5 + $0xc] sm:$0xf]
        %v592 = vld [vmem:[%s5 + $0x10] sm:$0xf]
        %v593 = vld [vmem:[%s5 + $0x14] sm:$0xf]
        %v594 = vld [vmem:[%s5 + $0x18] sm:$0xf]
        %v595 = vld [vmem:[%s5 + $0x1c] sm:$0xf]
        %v596 = vld [vmem:[%s5 + $0x20] sm:$0xf]
        %v597 = vld [vmem:[%s5 + $0x24] sm:$0xf]
        %v598 = vld [vmem:[%s5 + $0x28] sm:$0xf]
        %v599 = vld [vmem:[%s5 + $0x2c] sm:$0xf]
        %v600 = vld [vmem:[%s5 + $0x30] sm:$0xf]
        %v601 = vld [vmem:[%s5 + $0x34] sm:$0xf]
        %v602 = vld [vmem:[%s5 + $0x38] sm:$0xf]
        %v603 = vld [vmem:[%s5 + $0x3c] sm:$0xf]
        %v604 = vld [vmem:[%s6] sm:$0x1]
        %v606 = vlaneseq
        %v607 = vshrl.u32 %v606, 7
        %v608 = vsub.s32 0, %v607
        %v609 = vrot.slane %v604, %v608
        %v627 = vunpack.c.l.b16 %v588
        %v628 = vunpack.c.l.b16 %v589
        %v629 = vunpack.c.l.b16 %v590
        %v630 = vunpack.c.l.b16 %v591
        %v631 = vunpack.c.l.b16 %v592
        %v632 = vunpack.c.l.b16 %v593
        %v633 = vunpack.c.l.b16 %v594
        %v634 = vunpack.c.l.b16 %v595
        %v635 = vunpack.c.l.b16 %v596
        %v636 = vunpack.c.l.b16 %v597
        %v637 = vunpack.c.l.b16 %v598
        %v638 = vunpack.c.l.b16 %v599
        %v639 = vunpack.c.l.b16 %v600
        %v640 = vunpack.c.l.b16 %v601
        %v641 = vunpack.c.l.b16 %v602
        %v642 = vunpack.c.l.b16 %v603
        %v643 = vpack.c.b16 %v628, %v627
        %v644 = vpack.c.b16 %v630, %v629
        %v645 = vpack.c.b16 %v632, %v631
        %v646 = vpack.c.b16 %v634, %v633
        %v647 = vpack.c.b16 %v636, %v635
        %v648 = vpack.c.b16 %v638, %v637
        %v649 = vpack.c.b16 %v640, %v639
        %v650 = vpack.c.b16 %v642, %v641
        %659 = vmatprep.subr.bf16.mxu0 0
        %660 = vmatpush1.bf16.msra.mxu0 %v643
        %661 = vmatprep.subr.bf16.mxu0 0
        %662 = vmatpush1.bf16.msra.mxu0 %v644
        %663 = vmatprep.subr.bf16.mxu0 0
        %664 = vmatpush1.bf16.msra.mxu0 %v645
        %665 = vmatprep.subr.bf16.mxu0 0
        %666 = vmatpush1.bf16.msra.mxu0 %v646
        %667 = vmatprep.subr.bf16.mxu0 0
        %668 = vmatpush1.bf16.msra.mxu0 %v647
        %669 = vmatprep.subr.bf16.mxu0 0
        %670 = vmatpush1.bf16.msra.mxu0 %v648
        %671 = vmatprep.subr.bf16.mxu0 0
        %672 = vmatpush1.bf16.msra.mxu0 %v649
        %673 = vmatprep.subr.bf16.mxu0 0
        %674 = vmatpush1.bf16.msra.mxu0 %v650
        %675 = vmatprep.subr.bf16.mxu0 0
        %676 = vmatpush1.bf16.msra.mxu0 0
        %677 = vmatprep.subr.bf16.mxu0 0
        %678 = vmatpush1.bf16.msra.mxu0 0
        %679 = vmatprep.subr.bf16.mxu0 0
        %680 = vmatpush1.bf16.msra.mxu0 0
        %681 = vmatprep.subr.bf16.mxu0 0
        %682 = vmatpush1.bf16.msra.mxu0 0
        %683 = vmatprep.subr.bf16.mxu0 0
        %684 = vmatpush1.bf16.msra.mxu0 0
        %685 = vmatprep.subr.bf16.mxu0 0
        %686 = vmatpush1.bf16.msra.mxu0 0
        %687 = vmatprep.subr.bf16.mxu0 0
        %688 = vmatpush1.bf16.msra.mxu0 0
        %689 = vmatprep.subr.bf16.mxu0 0
        %690 = vmatpush1.bf16.msra.mxu0 0
        %691 = vmatprep.mubr.bf16.mxu0 0
        %692 = vmatmul.mubr.bf16.gmra.mrb[0].mxu0 %v476
        %v693 = vpop.f32.mrb[0].mxu0
        %v694 = vadd.f32 %v609, %v693
        %v695 = vpop.f32.mrb[0].mxu0
        %v696 = vpop.f32.mrb[0].mxu0
        %v697 = vadd.f32 %v609, %v696
        %v698 = vpop.f32.mrb[0].mxu0
        %699 = vdwg.mxu0
        %v700 = vld [vmem:[%s7] sm:$0xf]
        %v701 = vld [vmem:[%s7 + $0x4] sm:$0xf]
        %v702 = vld [vmem:[%s7 + $0x8] sm:$0xf]
        %v703 = vld [vmem:[%s7 + $0xc] sm:$0xf]
        %v704 = vld [vmem:[%s7 + $0x10] sm:$0xf]
        %v705 = vld [vmem:[%s7 + $0x14] sm:$0xf]
        %v706 = vld [vmem:[%s7 + $0x18] sm:$0xf]
        %v707 = vld [vmem:[%s7 + $0x1c] sm:$0xf]
        %v708 = vld [vmem:[%s7 + $0x20] sm:$0xf]
        %v709 = vld [vmem:[%s7 + $0x24] sm:$0xf]
        %v710 = vld [vmem:[%s7 + $0x28] sm:$0xf]
        %v711 = vld [vmem:[%s7 + $0x2c] sm:$0xf]
        %v712 = vld [vmem:[%s7 + $0x30] sm:$0xf]
        %v713 = vld [vmem:[%s7 + $0x34] sm:$0xf]
        %v714 = vld [vmem:[%s7 + $0x38] sm:$0xf]
        %v715 = vld [vmem:[%s7 + $0x3c] sm:$0xf]
        %v716 = vld [vmem:[%s8] sm:$0x1]
        %v718 = vlaneseq
        %v719 = vshrl.u32 %v718, 7
        %v720 = vsub.s32 0, %v719
        %v721 = vrot.slane %v716, %v720
        %v739 = vunpack.c.l.b16 %v700
        %v740 = vunpack.c.l.b16 %v701
        %v741 = vunpack.c.l.b16 %v702
        %v742 = vunpack.c.l.b16 %v703
        %v743 = vunpack.c.l.b16 %v704
        %v744 = vunpack.c.l.b16 %v705
        %v745 = vunpack.c.l.b16 %v706
        %v746 = vunpack.c.l.b16 %v707
        %v747 = vunpack.c.l.b16 %v708
        %v748 = vunpack.c.l.b16 %v709
        %v749 = vunpack.c.l.b16 %v710
        %v750 = vunpack.c.l.b16 %v711
        %v751 = vunpack.c.l.b16 %v712
        %v752 = vunpack.c.l.b16 %v713
        %v753 = vunpack.c.l.b16 %v714
        %v754 = vunpack.c.l.b16 %v715
        %v755 = vpack.c.b16 %v740, %v739
        %v756 = vpack.c.b16 %v742, %v741
        %v757 = vpack.c.b16 %v744, %v743
        %v758 = vpack.c.b16 %v746, %v745
        %v759 = vpack.c.b16 %v748, %v747
        %v760 = vpack.c.b16 %v750, %v749
        %v761 = vpack.c.b16 %v752, %v751
        %v762 = vpack.c.b16 %v754, %v753
        %771 = vmatprep.subr.bf16.mxu0 0
        %772 = vmatpush1.bf16.msra.mxu0 %v755
        %773 = vmatprep.subr.bf16.mxu0 0
        %774 = vmatpush1.bf16.msra.mxu0 %v756
        %775 = vmatprep.subr.bf16.mxu0 0
        %776 = vmatpush1.bf16.msra.mxu0 %v757
        %777 = vmatprep.subr.bf16.mxu0 0
        %778 = vmatpush1.bf16.msra.mxu0 %v758
        %779 = vmatprep.subr.bf16.mxu0 0
        %780 = vmatpush1.bf16.msra.mxu0 %v759
        %781 = vmatprep.subr.bf16.mxu0 0
        %782 = vmatpush1.bf16.msra.mxu0 %v760
        %783 = vmatprep.subr.bf16.mxu0 0
        %784 = vmatpush1.bf16.msra.mxu0 %v761
        %785 = vmatprep.subr.bf16.mxu0 0
        %786 = vmatpush1.bf16.msra.mxu0 %v762
        %787 = vmatprep.subr.bf16.mxu0 0
        %788 = vmatpush1.bf16.msra.mxu0 0
        %789 = vmatprep.subr.bf16.mxu0 0
        %790 = vmatpush1.bf16.msra.mxu0 0
        %791 = vmatprep.subr.bf16.mxu0 0
        %792 = vmatpush1.bf16.msra.mxu0 0
        %793 = vmatprep.subr.bf16.mxu0 0
        %794 = vmatpush1.bf16.msra.mxu0 0
        %795 = vmatprep.subr.bf16.mxu0 0
        %796 = vmatpush1.bf16.msra.mxu0 0
        %797 = vmatprep.subr.bf16.mxu0 0
        %798 = vmatpush1.bf16.msra.mxu0 0
        %799 = vmatprep.subr.bf16.mxu0 0
        %800 = vmatpush1.bf16.msra.mxu0 0
        %801 = vmatprep.subr.bf16.mxu0 0
        %802 = vmatpush1.bf16.msra.mxu0 0
        %803 = vmatprep.mubr.bf16.mxu0 0
        %804 = vmatmul.mubr.bf16.gmra.mrb[0].mxu0 %v476
        %v805 = vpop.f32.mrb[0].mxu0
        %v806 = vadd.f32 %v721, %v805
        %v807 = vpop.f32.mrb[0].mxu0
        %v808 = vpop.f32.mrb[0].mxu0
        %v809 = vadd.f32 %v721, %v808
        %v810 = vpop.f32.mrb[0].mxu0
        %811 = vdwg.mxu0
        %v812 = vpack.c.bf16 %v583, %v583
        %v813 = vpack.c.bf16 %v697, %v694
        %vm814 = vcmask 261120
        %v816 = vsel %vm814, %v812, 0
        %v819 = vsel %vm814, %v813, 0
        %821 = vmatprep.subr.bf16.mxu0 0
        %822 = vmatpush1.bf16.xpose.msra.mxu0 %v819
        %823 = vmatprep.subr.bf16.mxu0 0
        %824 = vmatpush1.bf16.xpose.msra.mxu0 0
        %825 = vmatprep.subr.bf16.mxu0 0
        %826 = vmatpush1.bf16.xpose.msra.mxu0 0
        %827 = vmatprep.subr.bf16.mxu0 0
        %828 = vmatpush1.bf16.xpose.msra.mxu0 0
        %829 = vmatprep.subr.bf16.mxu0 0
        %830 = vmatpush1.bf16.xpose.msra.mxu0 0
        %831 = vmatprep.subr.bf16.mxu0 0
        %832 = vmatpush1.bf16.xpose.msra.mxu0 0
        %833 = vmatprep.subr.bf16.mxu0 0
        %834 = vmatpush1.bf16.xpose.msra.mxu0 0
        %835 = vmatprep.subr.bf16.mxu0 0
        %836 = vmatpush1.bf16.xpose.msra.mxu0 0
        %837 = vmatprep.subr.bf16.mxu0 0
        %838 = vmatpush1.bf16.xpose.msra.mxu0 0
        %839 = vmatprep.subr.bf16.mxu0 0
        %840 = vmatpush1.bf16.xpose.msra.mxu0 0
        %841 = vmatprep.subr.bf16.mxu0 0
        %842 = vmatpush1.bf16.xpose.msra.mxu0 0
        %843 = vmatprep.subr.bf16.mxu0 0
        %844 = vmatpush1.bf16.xpose.msra.mxu0 0
        %845 = vmatprep.subr.bf16.mxu0 0
        %846 = vmatpush1.bf16.xpose.msra.mxu0 0
        %847 = vmatprep.subr.bf16.mxu0 0
        %848 = vmatpush1.bf16.xpose.msra.mxu0 0
        %849 = vmatprep.subr.bf16.mxu0 0
        %850 = vmatpush1.bf16.xpose.msra.mxu0 0
        %851 = vmatprep.subr.bf16.mxu0 0
        %852 = vmatpush1.bf16.xpose.msra.mxu0 0
        %853 = vmatprep.mubr.bf16.mxu0 0
        %854 = vmatmul.mubr.bf16.gmra.mrb[0].mxu0 %v816
        %v855 = vpop.f32.mrb[0].mxu0
        %v856 = vadd.f32 0.0, %v855
        %v857 = vpop.f32.mrb[0].mxu0
        %v858 = vpop.f32.mrb[0].mxu0
        %v859 = vpop.f32.mrb[0].mxu0
        %860 = vdwg.mxu0
        %v861 = vmul.f32 %v856, 0.17677669
        %v863 = vlaneseq
        %v864 = vshrl.u32 %v863, 7
        %v865 = vsub.s32 0, %v864
        %v866 = vrot.slane %v474, %v865
        %v868 = vadd.f32 %v861, %v866
        %vm869 = vcmask 130048
        %v870 = vsel %vm869, %v868, -inf
        %871 = vmax.xlane.f32.xlu0 %v870
        %v872 = vpop.xlane.xlu0 %871
        %v873 = vsub.f32 %v868, %v872
        %v874 = vmul.f32 %v873, 1.442695
        %v875 = vpow.pop %v874
        %v876 = vsel %vm869, %v875, 0.0
        %877 = vadd.xlane.f32.xlu0 %v876
        %v878 = vpop.xlane.xlu0 %877
        %v879 = vrcp.pop %v878
        %v880 = vmul.f32 %v875, %v879
        %v881 = vpack.c.bf16 %v880, %v880
        %v882 = vpack.c.bf16 %v809, %v806
        %v884 = vsel %vm869, %v881, 0
        %886 = vmatprep.subr.bf16.mxu0 0
        %887 = vmatpush1.bf16.msra.mxu0 %v882
        %888 = vmatprep.subr.bf16.mxu0 0
        %889 = vmatpush1.bf16.msra.mxu0 0
        %890 = vmatprep.subr.bf16.mxu0 0
        %891 = vmatpush1.bf16.msra.mxu0 0
        %892 = vmatprep.subr.bf16.mxu0 0
        %893 = vmatpush1.bf16.msra.mxu0 0
        %894 = vmatprep.subr.bf16.mxu0 0
        %895 = vmatpush1.bf16.msra.mxu0 0
        %896 = vmatprep.subr.bf16.mxu0 0
        %897 = vmatpush1.bf16.msra.mxu0 0
        %898 = vmatprep.subr.bf16.mxu0 0
        %899 = vmatpush1.bf16.msra.mxu0 0
        %900 = vmatprep.subr.bf16.mxu0 0
        %901 = vmatpush1.bf16.msra.mxu0 0
        %902 = vmatprep.subr.bf16.mxu0 0
        %903 = vmatpush1.bf16.msra.mxu0 0
        %904 = vmatprep.subr.bf16.mxu0 0
        %905 = vmatpush1.bf16.msra.mxu0 0
        %906 = vmatprep.subr.bf16.mxu0 0
        %907 = vmatpush1.bf16.msra.mxu0 0
        %908 = vmatprep.subr.bf16.mxu0 0
        %909 = vmatpush1.bf16.msra.mxu0 0
        %910 = vmatprep.subr.bf16.mxu0 0
        %911 = vmatpush1.bf16.msra.mxu0 0
        %912 = vmatprep.subr.bf16.mxu0 0
        %913 = vmatpush1.bf16.msra.mxu0 0
        %914 = vmatprep.subr.bf16.mxu0 0
        %915 = vmatpush1.bf16.msra.mxu0 0
        %916 = vmatprep.subr.bf16.mxu0 0
        %917 = vmatpush1.bf16.msra.mxu0 0
        %918 = vmatprep.mubr.bf16.mxu0 0
        %919 = vmatmul.mubr.bf16.gmra.mrb[0].mxu0 %v884
        %v920 = vpop.f32.mrb[0].mxu0
        %v921 = vadd.f32 0.0, %v920
        %v922 = vpop.f32.mrb[0].mxu0
        %v923 = vpop.f32.mrb[0].mxu0
        %v924 = vpop.f32.mrb[0].mxu0
        %925 = vdwg.mxu0
        %v926 = vpack.c.bf16 %v921, %v921
        %v927 = vld [vmem:[%s9] sm:$0xf]
        %v928 = vld [vmem:[%s9 + $0x4] sm:$0xf]
        %v929 = vld [vmem:[%s9 + $0x8] sm:$0xf]
        %v930 = vld [vmem:[%s9 + $0xc] sm:$0xf]
        %s931 = scalar_lea.vmem %s3, 64
        %v932 = vld [vmem:[%s931] sm:$0xf]
        %v933 = vld [vmem:[%s931 + $0x4] sm:$0xf]
        %v934 = vld [vmem:[%s931 + $0x8] sm:$0xf]
        %v935 = vld [vmem:[%s931 + $0xc] sm:$0xf]
        %v936 = vld [vmem:[%s931 + $0x10] sm:$0xf]
        %v937 = vld [vmem:[%s931 + $0x14] sm:$0xf]
        %v938 = vld [vmem:[%s931 + $0x18] sm:$0xf]
        %v939 = vld [vmem:[%s931 + $0x1c] sm:$0xf]
        %v940 = vld [vmem:[%s931 + $0x20] sm:$0xf]
        %v941 = vld [vmem:[%s931 + $0x24] sm:$0xf]
        %v942 = vld [vmem:[%s931 + $0x28] sm:$0xf]
        %v943 = vld [vmem:[%s931 + $0x2c] sm:$0xf]
        %v944 = vld [vmem:[%s931 + $0x30] sm:$0xf]
        %v945 = vld [vmem:[%s931 + $0x34] sm:$0xf]
        %v946 = vld [vmem:[%s931 + $0x38] sm:$0xf]
        %v947 = vld [vmem:[%s931 + $0x3c] sm:$0xf]
        %s948 = scalar_lea.vmem %s4, 1
        %v949 = vld [vmem:[%s948] sm:$0x1]
        %v951 = vlaneseq
        %v952 = vshrl.u32 %v951, 7
        %v953 = vsub.s32 0, %v952
        %v954 = vrot.slane %v949, %v953
        %v972 = vunpack.c.l.b16 %v932
        %v973 = vunpack.c.l.b16 %v933
        %v974 = vunpack.c.l.b16 %v934
        %v975 = vunpack.c.l.b16 %v935
        %v976 = vunpack.c.l.b16 %v936
        %v977 = vunpack.c.l.b16 %v937
        %v978 = vunpack.c.l.b16 %v938
        %v979 = vunpack.c.l.b16 %v939
        %v980 = vunpack.c.l.b16 %v940
        %v981 = vunpack.c.l.b16 %v941
        %v982 = vunpack.c.l.b16 %v942
        %v983 = vunpack.c.l.b16 %v943
        %v984 = vunpack.c.l.b16 %v944
        %v985 = vunpack.c.l.b16 %v945
        %v986 = vunpack.c.l.b16 %v946
        %v987 = vunpack.c.l.b16 %v947
        %v988 = vpack.c.b16 %v973, %v972
        %v989 = vpack.c.b16 %v975, %v974
        %v990 = vpack.c.b16 %v977, %v976
        %v991 = vpack.c.b16 %v979, %v978
        %v992 = vpack.c.b16 %v981, %v980
        %v993 = vpack.c.b16 %v983, %v982
        %v994 = vpack.c.b16 %v985, %v984
        %v995 = vpack.c.b16 %v987, %v986
        %1004 = vmatprep.subr.bf16.mxu0 0
        %1005 = vmatpush1.bf16.msra.mxu0 %v988
        %1006 = vmatprep.subr.bf16.mxu0 0
        %1007 = vmatpush1.bf16.msra.mxu0 %v989
        %1008 = vmatprep.subr.bf16.mxu0 0
        %1009 = vmatpush1.bf16.msra.mxu0 %v990
        %1010 = vmatprep.subr.bf16.mxu0 0
        %1011 = vmatpush1.bf16.msra.mxu0 %v991
        %1012 = vmatprep.subr.bf16.mxu0 0
        %1013 = vmatpush1.bf16.msra.mxu0 %v992
        %1014 = vmatprep.subr.bf16.mxu0 0
        %1015 = vmatpush1.bf16.msra.mxu0 %v993
        %1016 = vmatprep.subr.bf16.mxu0 0
        %1017 = vmatpush1.bf16.msra.mxu0 %v994
        %1018 = vmatprep.subr.bf16.mxu0 0
        %1019 = vmatpush1.bf16.msra.mxu0 %v995
        %1020 = vmatprep.subr.bf16.mxu0 0
        %1021 = vmatpush1.bf16.msra.mxu0 0
        %1022 = vmatprep.subr.bf16.mxu0 0
        %1023 = vmatpush1.bf16.msra.mxu0 0
        %1024 = vmatprep.subr.bf16.mxu0 0
        %1025 = vmatpush1.bf16.msra.mxu0 0
        %1026 = vmatprep.subr.bf16.mxu0 0
        %1027 = vmatpush1.bf16.msra.mxu0 0
        %1028 = vmatprep.subr.bf16.mxu0 0
        %1029 = vmatpush1.bf16.msra.mxu0 0
        %1030 = vmatprep.subr.bf16.mxu0 0
        %1031 = vmatpush1.bf16.msra.mxu0 0
        %1032 = vmatprep.subr.bf16.mxu0 0
        %1033 = vmatpush1.bf16.msra.mxu0 0
        %1034 = vmatprep.subr.bf16.mxu0 0
        %1035 = vmatpush1.bf16.msra.mxu0 0
        %1036 = vmatprep.mubr.bf16.mxu0 0
        %1037 = vmatmul.mubr.bf16.gmra.mrb[0].mxu0 %v475
        %v1038 = vpop.f32.mrb[0].mxu0
        %v1039 = vadd.f32 %v954, %v1038
        %v1040 = vpop.f32.mrb[0].mxu0
        %v1041 = vpop.f32.mrb[0].mxu0
        %v1042 = vpop.f32.mrb[0].mxu0
        %1043 = vdwg.mxu0
        %s1044 = scalar_lea.vmem %s5, 64
        %v1045 = vld [vmem:[%s1044] sm:$0xf]
        %v1046 = vld [vmem:[%s1044 + $0x4] sm:$0xf]
        %v1047 = vld [vmem:[%s1044 + $0x8] sm:$0xf]
        %v1048 = vld [vmem:[%s1044 + $0xc] sm:$0xf]
        %v1049 = vld [vmem:[%s1044 + $0x10] sm:$0xf]
        %v1050 = vld [vmem:[%s1044 + $0x14] sm:$0xf]
        %v1051 = vld [vmem:[%s1044 + $0x18] sm:$0xf]
        %v1052 = vld [vmem:[%s1044 + $0x1c] sm:$0xf]
        %v1053 = vld [vmem:[%s1044 + $0x20] sm:$0xf]
        %v1054 = vld [vmem:[%s1044 + $0x24] sm:$0xf]
        %v1055 = vld [vmem:[%s1044 + $0x28] sm:$0xf]
        %v1056 = vld [vmem:[%s1044 + $0x2c] sm:$0xf]
        %v1057 = vld [vmem:[%s1044 + $0x30] sm:$0xf]
        %v1058 = vld [vmem:[%s1044 + $0x34] sm:$0xf]
        %v1059 = vld [vmem:[%s1044 + $0x38] sm:$0xf]
        %v1060 = vld [vmem:[%s1044 + $0x3c] sm:$0xf]
        %s1061 = scalar_lea.vmem %s6, 1
        %v1062 = vld [vmem:[%s1061] sm:$0x1]
        %v1064 = vlaneseq
        %v1065 = vshrl.u32 %v1064, 7
        %v1066 = vsub.s32 0, %v1065
        %v1067 = vrot.slane %v1062, %v1066
        %v1085 = vunpack.c.l.b16 %v1045
        %v1086 = vunpack.c.l.b16 %v1046
        %v1087 = vunpack.c.l.b16 %v1047
        %v1088 = vunpack.c.l.b16 %v1048
        %v1089 = vunpack.c.l.b16 %v1049
        %v1090 = vunpack.c.l.b16 %v1050
        %v1091 = vunpack.c.l.b16 %v1051
        %v1092 = vunpack.c.l.b16 %v1052
        %v1093 = vunpack.c.l.b16 %v1053
        %v1094 = vunpack.c.l.b16 %v1054
        %v1095 = vunpack.c.l.b16 %v1055
        %v1096 = vunpack.c.l.b16 %v1056
        %v1097 = vunpack.c.l.b16 %v1057
        %v1098 = vunpack.c.l.b16 %v1058
        %v1099 = vunpack.c.l.b16 %v1059
        %v1100 = vunpack.c.l.b16 %v1060
        %v1101 = vpack.c.b16 %v1086, %v1085
        %v1102 = vpack.c.b16 %v1088, %v1087
        %v1103 = vpack.c.b16 %v1090, %v1089
        %v1104 = vpack.c.b16 %v1092, %v1091
        %v1105 = vpack.c.b16 %v1094, %v1093
        %v1106 = vpack.c.b16 %v1096, %v1095
        %v1107 = vpack.c.b16 %v1098, %v1097
        %v1108 = vpack.c.b16 %v1100, %v1099
        %1117 = vmatprep.subr.bf16.mxu0 0
        %1118 = vmatpush1.bf16.msra.mxu0 %v1101
        %1119 = vmatprep.subr.bf16.mxu0 0
        %1120 = vmatpush1.bf16.msra.mxu0 %v1102
        %1121 = vmatprep.subr.bf16.mxu0 0
        %1122 = vmatpush1.bf16.msra.mxu0 %v1103
        %1123 = vmatprep.subr.bf16.mxu0 0
        %1124 = vmatpush1.bf16.msra.mxu0 %v1104
        %1125 = vmatprep.subr.bf16.mxu0 0
        %1126 = vmatpush1.bf16.msra.mxu0 %v1105
        %1127 = vmatprep.subr.bf16.mxu0 0
        %1128 = vmatpush1.bf16.msra.mxu0 %v1106
        %1129 = vmatprep.subr.bf16.mxu0 0
        %1130 = vmatpush1.bf16.msra.mxu0 %v1107
        %1131 = vmatprep.subr.bf16.mxu0 0
        %1132 = vmatpush1.bf16.msra.mxu0 %v1108
        %1133 = vmatprep.subr.bf16.mxu0 0
        %1134 = vmatpush1.bf16.msra.mxu0 0
        %1135 = vmatprep.subr.bf16.mxu0 0
        %1136 = vmatpush1.bf16.msra.mxu0 0
        %1137 = vmatprep.subr.bf16.mxu0 0
        %1138 = vmatpush1.bf16.msra.mxu0 0
        %1139 = vmatprep.subr.bf16.mxu0 0
        %1140 = vmatpush1.bf16.msra.mxu0 0
        %1141 = vmatprep.subr.bf16.mxu0 0
        %1142 = vmatpush1.bf16.msra.mxu0 0
        %1143 = vmatprep.subr.bf16.mxu0 0
        %1144 = vmatpush1.bf16.msra.mxu0 0
        %1145 = vmatprep.subr.bf16.mxu0 0
        %1146 = vmatpush1.bf16.msra.mxu0 0
        %1147 = vmatprep.subr.bf16.mxu0 0
        %1148 = vmatpush1.bf16.msra.mxu0 0
        %1149 = vmatprep.mubr.bf16.mxu0 0
        %1150 = vmatmul.mubr.bf16.gmra.mrb[0].mxu0 %v476
        %v1151 = vpop.f32.mrb[0].mxu0
        %v1152 = vadd.f32 %v1067, %v1151
        %v1153 = vpop.f32.mrb[0].mxu0
        %v1154 = vpop.f32.mrb[0].mxu0
        %v1155 = vadd.f32 %v1067, %v1154
        %v1156 = vpop.f32.mrb[0].mxu0
        %1157 = vdwg.mxu0
        %s1158 = scalar_lea.vmem %s7, 64
        %v1159 = vld [vmem:[%s1158] sm:$0xf]
        %v1160 = vld [vmem:[%s1158 + $0x4] sm:$0xf]
        %v1161 = vld [vmem:[%s1158 + $0x8] sm:$0xf]
        %v1162 = vld [vmem:[%s1158 + $0xc] sm:$0xf]
        %v1163 = vld [vmem:[%s1158 + $0x10] sm:$0xf]
        %v1164 = vld [vmem:[%s1158 + $0x14] sm:$0xf]
        %v1165 = vld [vmem:[%s1158 + $0x18] sm:$0xf]
        %v1166 = vld [vmem:[%s1158 + $0x1c] sm:$0xf]
        %v1167 = vld [vmem:[%s1158 + $0x20] sm:$0xf]
        %v1168 = vld [vmem:[%s1158 + $0x24] sm:$0xf]
        %v1169 = vld [vmem:[%s1158 + $0x28] sm:$0xf]
        %v1170 = vld [vmem:[%s1158 + $0x2c] sm:$0xf]
        %v1171 = vld [vmem:[%s1158 + $0x30] sm:$0xf]
        %v1172 = vld [vmem:[%s1158 + $0x34] sm:$0xf]
        %v1173 = vld [vmem:[%s1158 + $0x38] sm:$0xf]
        %v1174 = vld [vmem:[%s1158 + $0x3c] sm:$0xf]
        %s1175 = scalar_lea.vmem %s8, 1
        %v1176 = vld [vmem:[%s1175] sm:$0x1]
        %v1178 = vlaneseq
        %v1179 = vshrl.u32 %v1178, 7
        %v1180 = vsub.s32 0, %v1179
        %v1181 = vrot.slane %v1176, %v1180
        %v1199 = vunpack.c.l.b16 %v1159
        %v1200 = vunpack.c.l.b16 %v1160
        %v1201 = vunpack.c.l.b16 %v1161
        %v1202 = vunpack.c.l.b16 %v1162
        %v1203 = vunpack.c.l.b16 %v1163
        %v1204 = vunpack.c.l.b16 %v1164
        %v1205 = vunpack.c.l.b16 %v1165
        %v1206 = vunpack.c.l.b16 %v1166
        %v1207 = vunpack.c.l.b16 %v1167
        %v1208 = vunpack.c.l.b16 %v1168
        %v1209 = vunpack.c.l.b16 %v1169
        %v1210 = vunpack.c.l.b16 %v1170
        %v1211 = vunpack.c.l.b16 %v1171
        %v1212 = vunpack.c.l.b16 %v1172
        %v1213 = vunpack.c.l.b16 %v1173
        %v1214 = vunpack.c.l.b16 %v1174
        %v1215 = vpack.c.b16 %v1200, %v1199
        %v1216 = vpack.c.b16 %v1202, %v1201
        %v1217 = vpack.c.b16 %v1204, %v1203
        %v1218 = vpack.c.b16 %v1206, %v1205
        %v1219 = vpack.c.b16 %v1208, %v1207
        %v1220 = vpack.c.b16 %v1210, %v1209
        %v1221 = vpack.c.b16 %v1212, %v1211
        %v1222 = vpack.c.b16 %v1214, %v1213
        %1231 = vmatprep.subr.bf16.mxu0 0
        %1232 = vmatpush1.bf16.msra.mxu0 %v1215
        %1233 = vmatprep.subr.bf16.mxu0 0
        %1234 = vmatpush1.bf16.msra.mxu0 %v1216
        %1235 = vmatprep.subr.bf16.mxu0 0
        %1236 = vmatpush1.bf16.msra.mxu0 %v1217
        %1237 = vmatprep.subr.bf16.mxu0 0
        %1238 = vmatpush1.bf16.msra.mxu0 %v1218
        %1239 = vmatprep.subr.bf16.mxu0 0
        %1240 = vmatpush1.bf16.msra.mxu0 %v1219
        %1241 = vmatprep.subr.bf16.mxu0 0
        %1242 = vmatpush1.bf16.msra.mxu0 %v1220
        %1243 = vmatprep.subr.bf16.mxu0 0
        %1244 = vmatpush1.bf16.msra.mxu0 %v1221
        %1245 = vmatprep.subr.bf16.mxu0 0
        %1246 = vmatpush1.bf16.msra.mxu0 %v1222
        %1247 = vmatprep.subr.bf16.mxu0 0
        %1248 = vmatpush1.bf16.msra.mxu0 0
        %1249 = vmatprep.subr.bf16.mxu0 0
        %1250 = vmatpush1.bf16.msra.mxu0 0
        %1251 = vmatprep.subr.bf16.mxu0 0
        %1252 = vmatpush1.bf16.msra.mxu0 0
        %1253 = vmatprep.subr.bf16.mxu0 0
        %1254 = vmatpush1.bf16.msra.mxu0 0
        %1255 = vmatprep.subr.bf16.mxu0 0
        %1256 = vmatpush1.bf16.msra.mxu0 0
        %1257 = vmatprep.subr.bf16.mxu0 0
        %1258 = vmatpush1.bf16.msra.mxu0 0
        %1259 = vmatprep.subr.bf16.mxu0 0
        %1260 = vmatpush1.bf16.msra.mxu0 0
        %1261 = vmatprep.subr.bf16.mxu0 0
        %1262 = vmatpush1.bf16.msra.mxu0 0
        %1263 = vmatprep.mubr.bf16.mxu0 0
        %1264 = vmatmul.mubr.bf16.gmra.mrb[0].mxu0 %v476
        %v1265 = vpop.f32.mrb[0].mxu0
        %v1266 = vadd.f32 %v1181, %v1265
        %v1267 = vpop.f32.mrb[0].mxu0
        %v1268 = vpop.f32.mrb[0].mxu0
        %v1269 = vadd.f32 %v1181, %v1268
        %v1270 = vpop.f32.mrb[0].mxu0
        %1271 = vdwg.mxu0
        %v1272 = vpack.c.bf16 %v1039, %v1039
        %v1273 = vpack.c.bf16 %v1155, %v1152
        %v1275 = vsel %vm814, %v1272, 0
        %v1278 = vsel %vm814, %v1273, 0
        %1280 = vmatprep.subr.bf16.mxu0 0
        %1281 = vmatpush1.bf16.xpose.msra.mxu0 %v1278
        %1282 = vmatprep.subr.bf16.mxu0 0
        %1283 = vmatpush1.bf16.xpose.msra.mxu0 0
        %1284 = vmatprep.subr.bf16.mxu0 0
        %1285 = vmatpush1.bf16.xpose.msra.mxu0 0
        %1286 = vmatprep.subr.bf16.mxu0 0
        %1287 = vmatpush1.bf16.xpose.msra.mxu0 0
        %1288 = vmatprep.subr.bf16.mxu0 0
        %1289 = vmatpush1.bf16.xpose.msra.mxu0 0
        %1290 = vmatprep.subr.bf16.mxu0 0
        %1291 = vmatpush1.bf16.xpose.msra.mxu0 0
        %1292 = vmatprep.subr.bf16.mxu0 0
        %1293 = vmatpush1.bf16.xpose.msra.mxu0 0
        %1294 = vmatprep.subr.bf16.mxu0 0
        %1295 = vmatpush1.bf16.xpose.msra.mxu0 0
        %1296 = vmatprep.subr.bf16.mxu0 0
        %1297 = vmatpush1.bf16.xpose.msra.mxu0 0
        %1298 = vmatprep.subr.bf16.mxu0 0
        %1299 = vmatpush1.bf16.xpose.msra.mxu0 0
        %1300 = vmatprep.subr.bf16.mxu0 0
        %1301 = vmatpush1.bf16.xpose.msra.mxu0 0
        %1302 = vmatprep.subr.bf16.mxu0 0
        %1303 = vmatpush1.bf16.xpose.msra.mxu0 0
        %1304 = vmatprep.subr.bf16.mxu0 0
        %1305 = vmatpush1.bf16.xpose.msra.mxu0 0
        %1306 = vmatprep.subr.bf16.mxu0 0
        %1307 = vmatpush1.bf16.xpose.msra.mxu0 0
        %1308 = vmatprep.subr.bf16.mxu0 0
        %1309 = vmatpush1.bf16.xpose.msra.mxu0 0
        %1310 = vmatprep.subr.bf16.mxu0 0
        %1311 = vmatpush1.bf16.xpose.msra.mxu0 0
        %1312 = vmatprep.mubr.bf16.mxu0 0
        %1313 = vmatmul.mubr.bf16.gmra.mrb[0].mxu0 %v1275
        %v1314 = vpop.f32.mrb[0].mxu0
        %v1315 = vadd.f32 0.0, %v1314
        %v1316 = vpop.f32.mrb[0].mxu0
        %v1317 = vpop.f32.mrb[0].mxu0
        %v1318 = vpop.f32.mrb[0].mxu0
        %1319 = vdwg.mxu0
        %v1320 = vmul.f32 %v1315, 0.17677669
        %v1321 = vadd.f32 %v1320, %v866
        %v1322 = vsel %vm869, %v1321, -inf
        %1323 = vmax.xlane.f32.xlu0 %v1322
        %v1324 = vpop.xlane.xlu0 %1323
        %v1325 = vsub.f32 %v1321, %v1324
        %v1326 = vmul.f32 %v1325, 1.442695
        %v1327 = vpow.pop %v1326
        %v1328 = vsel %vm869, %v1327, 0.0
        %1329 = vadd.xlane.f32.xlu0 %v1328
        %v1330 = vpop.xlane.xlu0 %1329
        %v1331 = vrcp.pop %v1330
        %v1332 = vmul.f32 %v1327, %v1331
        %v1333 = vpack.c.bf16 %v1332, %v1332
        %v1334 = vpack.c.bf16 %v1269, %v1266
        %v1336 = vsel %vm869, %v1333, 0
        %1338 = vmatprep.subr.bf16.mxu0 0
        %1339 = vmatpush1.bf16.msra.mxu0 %v1334
        %1340 = vmatprep.subr.bf16.mxu0 0
        %1341 = vmatpush1.bf16.msra.mxu0 0
        %1342 = vmatprep.subr.bf16.mxu0 0
        %1343 = vmatpush1.bf16.msra.mxu0 0
        %1344 = vmatprep.subr.bf16.mxu0 0
        %1345 = vmatpush1.bf16.msra.mxu0 0
        %1346 = vmatprep.subr.bf16.mxu0 0
        %1347 = vmatpush1.bf16.msra.mxu0 0
        %1348 = vmatprep.subr.bf16.mxu0 0
        %1349 = vmatpush1.bf16.msra.mxu0 0
        %1350 = vmatprep.subr.bf16.mxu0 0
        %1351 = vmatpush1.bf16.msra.mxu0 0
        %1352 = vmatprep.subr.bf16.mxu0 0
        %1353 = vmatpush1.bf16.msra.mxu0 0
        %1354 = vmatprep.subr.bf16.mxu0 0
        %1355 = vmatpush1.bf16.msra.mxu0 0
        %1356 = vmatprep.subr.bf16.mxu0 0
        %1357 = vmatpush1.bf16.msra.mxu0 0
        %1358 = vmatprep.subr.bf16.mxu0 0
        %1359 = vmatpush1.bf16.msra.mxu0 0
        %1360 = vmatprep.subr.bf16.mxu0 0
        %1361 = vmatpush1.bf16.msra.mxu0 0
        %1362 = vmatprep.subr.bf16.mxu0 0
        %1363 = vmatpush1.bf16.msra.mxu0 0
        %1364 = vmatprep.subr.bf16.mxu0 0
        %1365 = vmatpush1.bf16.msra.mxu0 0
        %1366 = vmatprep.subr.bf16.mxu0 0
        %1367 = vmatpush1.bf16.msra.mxu0 0
        %1368 = vmatprep.subr.bf16.mxu0 0
        %1369 = vmatpush1.bf16.msra.mxu0 0
        %1370 = vmatprep.mubr.bf16.mxu0 0
        %1371 = vmatmul.mubr.bf16.gmra.mrb[0].mxu0 %v1336
        %v1372 = vpop.f32.mrb[0].mxu0
        %v1373 = vadd.f32 0.0, %v1372
        %v1374 = vpop.f32.mrb[0].mxu0
        %v1375 = vpop.f32.mrb[0].mxu0
        %v1376 = vpop.f32.mrb[0].mxu0
        %1377 = vdwg.mxu0
        %v1378 = vpack.c.bf16 %v1373, %v1373
        %s1379 = scalar_lea.vmem %s9, 16
        %v1380 = vld [vmem:[%s1379] sm:$0xf]
        %v1381 = vld [vmem:[%s1379 + $0x4] sm:$0xf]
        %v1382 = vld [vmem:[%s1379 + $0x8] sm:$0xf]
        %v1383 = vld [vmem:[%s1379 + $0xc] sm:$0xf]
        %v1388 = vunpack.c.l.b16 %v1380
        %v1389 = vunpack.c.l.b16 %v1381
        %v1390 = vunpack.c.l.b16 %v1382
        %v1391 = vunpack.c.l.b16 %v1383
        %v1392 = vpack.c.b16 %v1389, %v1388
        %v1393 = vpack.c.b16 %v1391, %v1390
        %v1397 = vsel %vm814, %v1378, 0
        %1399 = vmatprep.subr.bf16.mxu0 0
        %1400 = vmatpush1.bf16.msra.mxu0 %v1392
        %1401 = vmatprep.subr.bf16.mxu0 0
        %1402 = vmatpush1.bf16.msra.mxu0 %v1393
        %1403 = vmatprep.subr.bf16.mxu0 0
        %1404 = vmatpush1.bf16.msra.mxu0 0
        %1405 = vmatprep.subr.bf16.mxu0 0
        %1406 = vmatpush1.bf16.msra.mxu0 0
        %1407 = vmatprep.subr.bf16.mxu0 0
        %1408 = vmatpush1.bf16.msra.mxu0 0
        %1409 = vmatprep.subr.bf16.mxu0 0
        %1410 = vmatpush1.bf16.msra.mxu0 0
        %1411 = vmatprep.subr.bf16.mxu0 0
        %1412 = vmatpush1.bf16.msra.mxu0 0
        %1413 = vmatprep.subr.bf16.mxu0 0
        %1414 = vmatpush1.bf16.msra.mxu0 0
        %1415 = vmatprep.subr.bf16.mxu0 0
        %1416 = vmatpush1.bf16.msra.mxu0 0
        %1417 = vmatprep.subr.bf16.mxu0 0
        %1418 = vmatpush1.bf16.msra.mxu0 0
        %1419 = vmatprep.subr.bf16.mxu0 0
        %1420 = vmatpush1.bf16.msra.mxu0 0
        %1421 = vmatprep.subr.bf16.mxu0 0
        %1422 = vmatpush1.bf16.msra.mxu0 0
        %1423 = vmatprep.subr.bf16.mxu0 0
        %1424 = vmatpush1.bf16.msra.mxu0 0
        %1425 = vmatprep.subr.bf16.mxu0 0
        %1426 = vmatpush1.bf16.msra.mxu0 0
        %1427 = vmatprep.subr.bf16.mxu0 0
        %1428 = vmatpush1.bf16.msra.mxu0 0
        %1429 = vmatprep.subr.bf16.mxu0 0
        %1430 = vmatpush1.bf16.msra.mxu0 0
        %1431 = vmatprep.mubr.bf16.mxu0 0
        %1432 = vmatmul.mubr.bf16.gmra.mrb[0].mxu0 %v1397
        %v1433 = vpop.f32.mrb[0].mxu0
        %v1434 = vadd.f32 0.0, %v1433
        %v1435 = vpop.f32.mrb[0].mxu0
        %v1436 = vpop.f32.mrb[0].mxu0
        %v1437 = vpop.f32.mrb[0].mxu0
        %1438 = vdwg.mxu0
        %v1443 = vunpack.c.l.b16 %v927
        %v1444 = vunpack.c.l.b16 %v928
        %v1445 = vunpack.c.l.b16 %v929
        %v1446 = vunpack.c.l.b16 %v930
        %v1447 = vpack.c.b16 %v1444, %v1443
        %v1448 = vpack.c.b16 %v1446, %v1445
        %v1452 = vsel %vm814, %v926, 0
        %1454 = vmatprep.subr.bf16.mxu0 0
        %1455 = vmatpush1.bf16.msra.mxu0 %v1447
        %1456 = vmatprep.subr.bf16.mxu0 0
        %1457 = vmatpush1.bf16.msra.mxu0 %v1448
        %1458 = vmatprep.subr.bf16.mxu0 0
        %1459 = vmatpush1.bf16.msra.mxu0 0
        %1460 = vmatprep.subr.bf16.mxu0 0
        %1461 = vmatpush1.bf16.msra.mxu0 0
        %1462 = vmatprep.subr.bf16.mxu0 0
        %1463 = vmatpush1.bf16.msra.mxu0 0
        %1464 = vmatprep.subr.bf16.mxu0 0
        %1465 = vmatpush1.bf16.msra.mxu0 0
        %1466 = vmatprep.subr.bf16.mxu0 0
        %1467 = vmatpush1.bf16.msra.mxu0 0
        %1468 = vmatprep.subr.bf16.mxu0 0
        %1469 = vmatpush1.bf16.msra.mxu0 0
        %1470 = vmatprep.subr.bf16.mxu0 0
        %1471 = vmatpush1.bf16.msra.mxu0 0
        %1472 = vmatprep.subr.bf16.mxu0 0
        %1473 = vmatpush1.bf16.msra.mxu0 0
        %1474 = vmatprep.subr.bf16.mxu0 0
        %1475 = vmatpush1.bf16.msra.mxu0 0
        %1476 = vmatprep.subr.bf16.mxu0 0
        %1477 = vmatpush1.bf16.msra.mxu0 0
        %1478 = vmatprep.subr.bf16.mxu0 0
        %1479 = vmatpush1.bf16.msra.mxu0 0
        %1480 = vmatprep.subr.bf16.mxu0 0
        %1481 = vmatpush1.bf16.msra.mxu0 0
        %1482 = vmatprep.subr.bf16.mxu0 0
        %1483 = vmatpush1.bf16.msra.mxu0 0
        %1484 = vmatprep.subr.bf16.mxu0 0
        %1485 = vmatpush1.bf16.msra.mxu0 0
        %1486 = vmatprep.mubr.bf16.mxu0 0
        %1487 = vmatmul.mubr.bf16.gmra.mrb[0].mxu0 %v1452
        %v1488 = vpop.f32.mrb[0].mxu0
        %v1489 = vadd.f32 %v1434, %v1488
        %v1490 = vpop.f32.mrb[0].mxu0
        %v1491 = vpop.f32.mrb[0].mxu0
        %v1492 = vpop.f32.mrb[0].mxu0
        %1493 = vdwg.mxu0
        %s1494 = scalar_lea.vmem %s3, 128
        %v1495 = vld [vmem:[%s1494] sm:$0xf]
        %v1496 = vld [vmem:[%s1494 + $0x4] sm:$0xf]
        %v1497 = vld [vmem:[%s1494 + $0x8] sm:$0xf]
        %v1498 = vld [vmem:[%s1494 + $0xc] sm:$0xf]
        %v1499 = vld [vmem:[%s1494 + $0x10] sm:$0xf]
        %v1500 = vld [vmem:[%s1494 + $0x14] sm:$0xf]
        %v1501 = vld [vmem:[%s1494 + $0x18] sm:$0xf]
        %v1502 = vld [vmem:[%s1494 + $0x1c] sm:$0xf]
        %v1503 = vld [vmem:[%s1494 + $0x20] sm:$0xf]
        %v1504 = vld [vmem:[%s1494 + $0x24] sm:$0xf]
        %v1505 = vld [vmem:[%s1494 + $0x28] sm:$0xf]
        %v1506 = vld [vmem:[%s1494 + $0x2c] sm:$0xf]
        %v1507 = vld [vmem:[%s1494 + $0x30] sm:$0xf]
        %v1508 = vld [vmem:[%s1494 + $0x34] sm:$0xf]
        %v1509 = vld [vmem:[%s1494 + $0x38] sm:$0xf]
        %v1510 = vld [vmem:[%s1494 + $0x3c] sm:$0xf]
        %s1511 = scalar_lea.vmem %s4, 2
        %v1512 = vld [vmem:[%s1511] sm:$0x1]
        %v1514 = vlaneseq
        %v1515 = vshrl.u32 %v1514, 7
        %v1516 = vsub.s32 0, %v1515
        %v1517 = vrot.slane %v1512, %v1516
        %v1535 = vunpack.c.l.b16 %v1495
        %v1536 = vunpack.c.l.b16 %v1496
        %v1537 = vunpack.c.l.b16 %v1497
        %v1538 = vunpack.c.l.b16 %v1498
        %v1539 = vunpack.c.l.b16 %v1499
        %v1540 = vunpack.c.l.b16 %v1500
        %v1541 = vunpack.c.l.b16 %v1501
        %v1542 = vunpack.c.l.b16 %v1502
        %v1543 = vunpack.c.l.b16 %v1503
        %v1544 = vunpack.c.l.b16 %v1504
        %v1545 = vunpack.c.l.b16 %v1505
        %v1546 = vunpack.c.l.b16 %v1506
        %v1547 = vunpack.c.l.b16 %v1507
        %v1548 = vunpack.c.l.b16 %v1508
        %v1549 = vunpack.c.l.b16 %v1509
        %v1550 = vunpack.c.l.b16 %v1510
        %v1551 = vpack.c.b16 %v1536, %v1535
        %v1552 = vpack.c.b16 %v1538, %v1537
        %v1553 = vpack.c.b16 %v1540, %v1539
        %v1554 = vpack.c.b16 %v1542, %v1541
        %v1555 = vpack.c.b16 %v1544, %v1543
        %v1556 = vpack.c.b16 %v1546, %v1545
        %v1557 = vpack.c.b16 %v1548, %v1547
        %v1558 = vpack.c.b16 %v1550, %v1549
        %1567 = vmatprep.subr.bf16.mxu0 0
        %1568 = vmatpush1.bf16.msra.mxu0 %v1551
        %1569 = vmatprep.subr.bf16.mxu0 0
        %1570 = vmatpush1.bf16.msra.mxu0 %v1552
        %1571 = vmatprep.subr.bf16.mxu0 0
        %1572 = vmatpush1.bf16.msra.mxu0 %v1553
        %1573 = vmatprep.subr.bf16.mxu0 0
        %1574 = vmatpush1.bf16.msra.mxu0 %v1554
        %1575 = vmatprep.subr.bf16.mxu0 0
        %1576 = vmatpush1.bf16.msra.mxu0 %v1555
        %1577 = vmatprep.subr.bf16.mxu0 0
        %1578 = vmatpush1.bf16.msra.mxu0 %v1556
        %1579 = vmatprep.subr.bf16.mxu0 0
        %1580 = vmatpush1.bf16.msra.mxu0 %v1557
        %1581 = vmatprep.subr.bf16.mxu0 0
        %1582 = vmatpush1.bf16.msra.mxu0 %v1558
        %1583 = vmatprep.subr.bf16.mxu0 0
        %1584 = vmatpush1.bf16.msra.mxu0 0
        %1585 = vmatprep.subr.bf16.mxu0 0
        %1586 = vmatpush1.bf16.msra.mxu0 0
        %1587 = vmatprep.subr.bf16.mxu0 0
        %1588 = vmatpush1.bf16.msra.mxu0 0
        %1589 = vmatprep.subr.bf16.mxu0 0
        %1590 = vmatpush1.bf16.msra.mxu0 0
        %1591 = vmatprep.subr.bf16.mxu0 0
        %1592 = vmatpush1.bf16.msra.mxu0 0
        %1593 = vmatprep.subr.bf16.mxu0 0
        %1594 = vmatpush1.bf16.msra.mxu0 0
        %1595 = vmatprep.subr.bf16.mxu0 0
        %1596 = vmatpush1.bf16.msra.mxu0 0
        %1597 = vmatprep.subr.bf16.mxu0 0
        %1598 = vmatpush1.bf16.msra.mxu0 0
        %1599 = vmatprep.mubr.bf16.mxu0 0
        %1600 = vmatmul.mubr.bf16.gmra.mrb[0].mxu0 %v475
        %v1601 = vpop.f32.mrb[0].mxu0
        %v1602 = vadd.f32 %v1517, %v1601
        %v1603 = vpop.f32.mrb[0].mxu0
        %v1604 = vpop.f32.mrb[0].mxu0
        %v1605 = vpop.f32.mrb[0].mxu0
        %1606 = vdwg.mxu0
        %s1607 = scalar_lea.vmem %s5, 128
        %v1608 = vld [vmem:[%s1607] sm:$0xf]
        %v1609 = vld [vmem:[%s1607 + $0x4] sm:$0xf]
        %v1610 = vld [vmem:[%s1607 + $0x8] sm:$0xf]
        %v1611 = vld [vmem:[%s1607 + $0xc] sm:$0xf]
        %v1612 = vld [vmem:[%s1607 + $0x10] sm:$0xf]
        %v1613 = vld [vmem:[%s1607 + $0x14] sm:$0xf]
        %v1614 = vld [vmem:[%s1607 + $0x18] sm:$0xf]
        %v1615 = vld [vmem:[%s1607 + $0x1c] sm:$0xf]
        %v1616 = vld [vmem:[%s1607 + $0x20] sm:$0xf]
        %v1617 = vld [vmem:[%s1607 + $0x24] sm:$0xf]
        %v1618 = vld [vmem:[%s1607 + $0x28] sm:$0xf]
        %v1619 = vld [vmem:[%s1607 + $0x2c] sm:$0xf]
        %v1620 = vld [vmem:[%s1607 + $0x30] sm:$0xf]
        %v1621 = vld [vmem:[%s1607 + $0x34] sm:$0xf]
        %v1622 = vld [vmem:[%s1607 + $0x38] sm:$0xf]
        %v1623 = vld [vmem:[%s1607 + $0x3c] sm:$0xf]
        %s1624 = scalar_lea.vmem %s6, 2
        %v1625 = vld [vmem:[%s1624] sm:$0x1]
        %v1627 = vlaneseq
        %v1628 = vshrl.u32 %v1627, 7
        %v1629 = vsub.s32 0, %v1628
        %v1630 = vrot.slane %v1625, %v1629
        %v1648 = vunpack.c.l.b16 %v1608
        %v1649 = vunpack.c.l.b16 %v1609
        %v1650 = vunpack.c.l.b16 %v1610
        %v1651 = vunpack.c.l.b16 %v1611
        %v1652 = vunpack.c.l.b16 %v1612
        %v1653 = vunpack.c.l.b16 %v1613
        %v1654 = vunpack.c.l.b16 %v1614
        %v1655 = vunpack.c.l.b16 %v1615
        %v1656 = vunpack.c.l.b16 %v1616
        %v1657 = vunpack.c.l.b16 %v1617
        %v1658 = vunpack.c.l.b16 %v1618
        %v1659 = vunpack.c.l.b16 %v1619
        %v1660 = vunpack.c.l.b16 %v1620
        %v1661 = vunpack.c.l.b16 %v1621
        %v1662 = vunpack.c.l.b16 %v1622
        %v1663 = vunpack.c.l.b16 %v1623
        %v1664 = vpack.c.b16 %v1649, %v1648
        %v1665 = vpack.c.b16 %v1651, %v1650
        %v1666 = vpack.c.b16 %v1653, %v1652
        %v1667 = vpack.c.b16 %v1655, %v1654
        %v1668 = vpack.c.b16 %v1657, %v1656
        %v1669 = vpack.c.b16 %v1659, %v1658
        %v1670 = vpack.c.b16 %v1661, %v1660
        %v1671 = vpack.c.b16 %v1663, %v1662
        %1680 = vmatprep.subr.bf16.mxu0 0
        %1681 = vmatpush1.bf16.msra.mxu0 %v1664
        %1682 = vmatprep.subr.bf16.mxu0 0
        %1683 = vmatpush1.bf16.msra.mxu0 %v1665
        %1684 = vmatprep.subr.bf16.mxu0 0
        %1685 = vmatpush1.bf16.msra.mxu0 %v1666
        %1686 = vmatprep.subr.bf16.mxu0 0
        %1687 = vmatpush1.bf16.msra.mxu0 %v1667
        %1688 = vmatprep.subr.bf16.mxu0 0
        %1689 = vmatpush1.bf16.msra.mxu0 %v1668
        %1690 = vmatprep.subr.bf16.mxu0 0
        %1691 = vmatpush1.bf16.msra.mxu0 %v1669
        %1692 = vmatprep.subr.bf16.mxu0 0
        %1693 = vmatpush1.bf16.msra.mxu0 %v1670
        %1694 = vmatprep.subr.bf16.mxu0 0
        %1695 = vmatpush1.bf16.msra.mxu0 %v1671
        %1696 = vmatprep.subr.bf16.mxu0 0
        %1697 = vmatpush1.bf16.msra.mxu0 0
        %1698 = vmatprep.subr.bf16.mxu0 0
        %1699 = vmatpush1.bf16.msra.mxu0 0
        %1700 = vmatprep.subr.bf16.mxu0 0
        %1701 = vmatpush1.bf16.msra.mxu0 0
        %1702 = vmatprep.subr.bf16.mxu0 0
        %1703 = vmatpush1.bf16.msra.mxu0 0
        %1704 = vmatprep.subr.bf16.mxu0 0
        %1705 = vmatpush1.bf16.msra.mxu0 0
        %1706 = vmatprep.subr.bf16.mxu0 0
        %1707 = vmatpush1.bf16.msra.mxu0 0
        %1708 = vmatprep.subr.bf16.mxu0 0
        %1709 = vmatpush1.bf16.msra.mxu0 0
        %1710 = vmatprep.subr.bf16.mxu0 0
        %1711 = vmatpush1.bf16.msra.mxu0 0
        %1712 = vmatprep.mubr.bf16.mxu0 0
        %1713 = vmatmul.mubr.bf16.gmra.mrb[0].mxu0 %v476
        %v1714 = vpop.f32.mrb[0].mxu0
        %v1715 = vadd.f32 %v1630, %v1714
        %v1716 = vpop.f32.mrb[0].mxu0
        %v1717 = vpop.f32.mrb[0].mxu0
        %v1718 = vadd.f32 %v1630, %v1717
        %v1719 = vpop.f32.mrb[0].mxu0
        %1720 = vdwg.mxu0
        %s1721 = scalar_lea.vmem %s7, 128
        %v1722 = vld [vmem:[%s1721] sm:$0xf]
        %v1723 = vld [vmem:[%s1721 + $0x4] sm:$0xf]
        %v1724 = vld [vmem:[%s1721 + $0x8] sm:$0xf]
        %v1725 = vld [vmem:[%s1721 + $0xc] sm:$0xf]
        %v1726 = vld [vmem:[%s1721 + $0x10] sm:$0xf]
        %v1727 = vld [vmem:[%s1721 + $0x14] sm:$0xf]
        %v1728 = vld [vmem:[%s1721 + $0x18] sm:$0xf]
        %v1729 = vld [vmem:[%s1721 + $0x1c] sm:$0xf]
        %v1730 = vld [vmem:[%s1721 + $0x20] sm:$0xf]
        %v1731 = vld [vmem:[%s1721 + $0x24] sm:$0xf]
        %v1732 = vld [vmem:[%s1721 + $0x28] sm:$0xf]
        %v1733 = vld [vmem:[%s1721 + $0x2c] sm:$0xf]
        %v1734 = vld [vmem:[%s1721 + $0x30] sm:$0xf]
        %v1735 = vld [vmem:[%s1721 + $0x34] sm:$0xf]
        %v1736 = vld [vmem:[%s1721 + $0x38] sm:$0xf]
        %v1737 = vld [vmem:[%s1721 + $0x3c] sm:$0xf]
        %s1738 = scalar_lea.vmem %s8, 2
        %v1739 = vld [vmem:[%s1738] sm:$0x1]
        %v1741 = vlaneseq
        %v1742 = vshrl.u32 %v1741, 7
        %v1743 = vsub.s32 0, %v1742
        %v1744 = vrot.slane %v1739, %v1743
        %v1762 = vunpack.c.l.b16 %v1722
        %v1763 = vunpack.c.l.b16 %v1723
        %v1764 = vunpack.c.l.b16 %v1724
        %v1765 = vunpack.c.l.b16 %v1725
        %v1766 = vunpack.c.l.b16 %v1726
        %v1767 = vunpack.c.l.b16 %v1727
        %v1768 = vunpack.c.l.b16 %v1728
        %v1769 = vunpack.c.l.b16 %v1729
        %v1770 = vunpack.c.l.b16 %v1730
        %v1771 = vunpack.c.l.b16 %v1731
        %v1772 = vunpack.c.l.b16 %v1732
        %v1773 = vunpack.c.l.b16 %v1733
        %v1774 = vunpack.c.l.b16 %v1734
        %v1775 = vunpack.c.l.b16 %v1735
        %v1776 = vunpack.c.l.b16 %v1736
        %v1777 = vunpack.c.l.b16 %v1737
        %v1778 = vpack.c.b16 %v1763, %v1762
        %v1779 = vpack.c.b16 %v1765, %v1764
        %v1780 = vpack.c.b16 %v1767, %v1766
        %v1781 = vpack.c.b16 %v1769, %v1768
        %v1782 = vpack.c.b16 %v1771, %v1770
        %v1783 = vpack.c.b16 %v1773, %v1772
        %v1784 = vpack.c.b16 %v1775, %v1774
        %v1785 = vpack.c.b16 %v1777, %v1776
        %1794 = vmatprep.subr.bf16.mxu0 0
        %1795 = vmatpush1.bf16.msra.mxu0 %v1778
        %1796 = vmatprep.subr.bf16.mxu0 0
        %1797 = vmatpush1.bf16.msra.mxu0 %v1779
        %1798 = vmatprep.subr.bf16.mxu0 0
        %1799 = vmatpush1.bf16.msra.mxu0 %v1780
        %1800 = vmatprep.subr.bf16.mxu0 0
        %1801 = vmatpush1.bf16.msra.mxu0 %v1781
        %1802 = vmatprep.subr.bf16.mxu0 0
        %1803 = vmatpush1.bf16.msra.mxu0 %v1782
        %1804 = vmatprep.subr.bf16.mxu0 0
        %1805 = vmatpush1.bf16.msra.mxu0 %v1783
        %1806 = vmatprep.subr.bf16.mxu0 0
        %1807 = vmatpush1.bf16.msra.mxu0 %v1784
        %1808 = vmatprep.subr.bf16.mxu0 0
        %1809 = vmatpush1.bf16.msra.mxu0 %v1785
        %1810 = vmatprep.subr.bf16.mxu0 0
        %1811 = vmatpush1.bf16.msra.mxu0 0
        %1812 = vmatprep.subr.bf16.mxu0 0
        %1813 = vmatpush1.bf16.msra.mxu0 0
        %1814 = vmatprep.subr.bf16.mxu0 0
        %1815 = vmatpush1.bf16.msra.mxu0 0
        %1816 = vmatprep.subr.bf16.mxu0 0
        %1817 = vmatpush1.bf16.msra.mxu0 0
        %1818 = vmatprep.subr.bf16.mxu0 0
        %1819 = vmatpush1.bf16.msra.mxu0 0
        %1820 = vmatprep.subr.bf16.mxu0 0
        %1821 = vmatpush1.bf16.msra.mxu0 0
        %1822 = vmatprep.subr.bf16.mxu0 0
        %1823 = vmatpush1.bf16.msra.mxu0 0
        %1824 = vmatprep.subr.bf16.mxu0 0
        %1825 = vmatpush1.bf16.msra.mxu0 0
        %1826 = vmatprep.mubr.bf16.mxu0 0
        %1827 = vmatmul.mubr.bf16.gmra.mrb[0].mxu0 %v476
        %v1828 = vpop.f32.mrb[0].mxu0
        %v1829 = vadd.f32 %v1744, %v1828
        %v1830 = vpop.f32.mrb[0].mxu0
        %v1831 = vpop.f32.mrb[0].mxu0
        %v1832 = vadd.f32 %v1744, %v1831
        %v1833 = vpop.f32.mrb[0].mxu0
        %1834 = vdwg.mxu0
        %v1835 = vpack.c.bf16 %v1602, %v1602
        %v1836 = vpack.c.bf16 %v1718, %v1715
        %v1838 = vsel %vm814, %v1835, 0
        %v1841 = vsel %vm814, %v1836, 0
        %1843 = vmatprep.subr.bf16.mxu0 0
        %1844 = vmatpush1.bf16.xpose.msra.mxu0 %v1841
        %1845 = vmatprep.subr.bf16.mxu0 0
        %1846 = vmatpush1.bf16.xpose.msra.mxu0 0
        %1847 = vmatprep.subr.bf16.mxu0 0
        %1848 = vmatpush1.bf16.xpose.msra.mxu0 0
        %1849 = vmatprep.subr.bf16.mxu0 0
        %1850 = vmatpush1.bf16.xpose.msra.mxu0 0
        %1851 = vmatprep.subr.bf16.mxu0 0
        %1852 = vmatpush1.bf16.xpose.msra.mxu0 0
        %1853 = vmatprep.subr.bf16.mxu0 0
        %1854 = vmatpush1.bf16.xpose.msra.mxu0 0
        %1855 = vmatprep.subr.bf16.mxu0 0
        %1856 = vmatpush1.bf16.xpose.msra.mxu0 0
        %1857 = vmatprep.subr.bf16.mxu0 0
        %1858 = vmatpush1.bf16.xpose.msra.mxu0 0
        %1859 = vmatprep.subr.bf16.mxu0 0
        %1860 = vmatpush1.bf16.xpose.msra.mxu0 0
        %1861 = vmatprep.subr.bf16.mxu0 0
        %1862 = vmatpush1.bf16.xpose.msra.mxu0 0
        %1863 = vmatprep.subr.bf16.mxu0 0
        %1864 = vmatpush1.bf16.xpose.msra.mxu0 0
        %1865 = vmatprep.subr.bf16.mxu0 0
        %1866 = vmatpush1.bf16.xpose.msra.mxu0 0
        %1867 = vmatprep.subr.bf16.mxu0 0
        %1868 = vmatpush1.bf16.xpose.msra.mxu0 0
        %1869 = vmatprep.subr.bf16.mxu0 0
        %1870 = vmatpush1.bf16.xpose.msra.mxu0 0
        %1871 = vmatprep.subr.bf16.mxu0 0
        %1872 = vmatpush1.bf16.xpose.msra.mxu0 0
        %1873 = vmatprep.subr.bf16.mxu0 0
        %1874 = vmatpush1.bf16.xpose.msra.mxu0 0
        %1875 = vmatprep.mubr.bf16.mxu0 0
        %1876 = vmatmul.mubr.bf16.gmra.mrb[0].mxu0 %v1838
        %v1877 = vpop.f32.mrb[0].mxu0
        %v1878 = vadd.f32 0.0, %v1877
        %v1879 = vpop.f32.mrb[0].mxu0
        %v1880 = vpop.f32.mrb[0].mxu0
        %v1881 = vpop.f32.mrb[0].mxu0
        %1882 = vdwg.mxu0
        %v1883 = vmul.f32 %v1878, 0.17677669
        %v1884 = vadd.f32 %v1883, %v866
        %v1885 = vsel %vm869, %v1884, -inf
        %1886 = vmax.xlane.f32.xlu0 %v1885
        %v1887 = vpop.xlane.xlu0 %1886
        %v1888 = vsub.f32 %v1884, %v1887
        %v1889 = vmul.f32 %v1888, 1.442695
        %v1890 = vpow.pop %v1889
        %v1891 = vsel %vm869, %v1890, 0.0
        %1892 = vadd.xlane.f32.xlu0 %v1891
        %v1893 = vpop.xlane.xlu0 %1892
        %v1894 = vrcp.pop %v1893
        %v1895 = vmul.f32 %v1890, %v1894
        %v1896 = vpack.c.bf16 %v1895, %v1895
        %v1897 = vpack.c.bf16 %v1832, %v1829
        %v1899 = vsel %vm869, %v1896, 0
        %1901 = vmatprep.subr.bf16.mxu0 0
        %1902 = vmatpush1.bf16.msra.mxu0 %v1897
        %1903 = vmatprep.subr.bf16.mxu0 0
        %1904 = vmatpush1.bf16.msra.mxu0 0
        %1905 = vmatprep.subr.bf16.mxu0 0
        %1906 = vmatpush1.bf16.msra.mxu0 0
        %1907 = vmatprep.subr.bf16.mxu0 0
        %1908 = vmatpush1.bf16.msra.mxu0 0
        %1909 = vmatprep.subr.bf16.mxu0 0
        %1910 = vmatpush1.bf16.msra.mxu0 0
        %1911 = vmatprep.subr.bf16.mxu0 0
        %1912 = vmatpush1.bf16.msra.mxu0 0
        %1913 = vmatprep.subr.bf16.mxu0 0
        %1914 = vmatpush1.bf16.msra.mxu0 0
        %1915 = vmatprep.subr.bf16.mxu0 0
        %1916 = vmatpush1.bf16.msra.mxu0 0
        %1917 = vmatprep.subr.bf16.mxu0 0
        %1918 = vmatpush1.bf16.msra.mxu0 0
        %1919 = vmatprep.subr.bf16.mxu0 0
        %1920 = vmatpush1.bf16.msra.mxu0 0
        %1921 = vmatprep.subr.bf16.mxu0 0
        %1922 = vmatpush1.bf16.msra.mxu0 0
        %1923 = vmatprep.subr.bf16.mxu0 0
        %1924 = vmatpush1.bf16.msra.mxu0 0
        %1925 = vmatprep.subr.bf16.mxu0 0
        %1926 = vmatpush1.bf16.msra.mxu0 0
        %1927 = vmatprep.subr.bf16.mxu0 0
        %1928 = vmatpush1.bf16.msra.mxu0 0
        %1929 = vmatprep.subr.bf16.mxu0 0
        %1930 = vmatpush1.bf16.msra.mxu0 0
        %1931 = vmatprep.subr.bf16.mxu0 0
        %1932 = vmatpush1.bf16.msra.mxu0 0
        %1933 = vmatprep.mubr.bf16.mxu0 0
        %1934 = vmatmul.mubr.bf16.gmra.mrb[0].mxu0 %v1899
        %v1935 = vpop.f32.mrb[0].mxu0
        %v1936 = vadd.f32 0.0, %v1935
        %v1937 = vpop.f32.mrb[0].mxu0
        %v1938 = vpop.f32.mrb[0].mxu0
        %v1939 = vpop.f32.mrb[0].mxu0
        %1940 = vdwg.mxu0
        %v1941 = vpack.c.bf16 %v1936, %v1936
        %s1942 = scalar_lea.vmem %s9, 32
        %v1943 = vld [vmem:[%s1942] sm:$0xf]
        %v1944 = vld [vmem:[%s1942 + $0x4] sm:$0xf]
        %v1945 = vld [vmem:[%s1942 + $0x8] sm:$0xf]
        %v1946 = vld [vmem:[%s1942 + $0xc] sm:$0xf]
        %v1951 = vunpack.c.l.b16 %v1943
        %v1952 = vunpack.c.l.b16 %v1944
        %v1953 = vunpack.c.l.b16 %v1945
        %v1954 = vunpack.c.l.b16 %v1946
        %v1955 = vpack.c.b16 %v1952, %v1951
        %v1956 = vpack.c.b16 %v1954, %v1953
        %v1960 = vsel %vm814, %v1941, 0
        %1962 = vmatprep.subr.bf16.mxu0 0
        %1963 = vmatpush1.bf16.msra.mxu0 %v1955
        %1964 = vmatprep.subr.bf16.mxu0 0
        %1965 = vmatpush1.bf16.msra.mxu0 %v1956
        %1966 = vmatprep.subr.bf16.mxu0 0
        %1967 = vmatpush1.bf16.msra.mxu0 0
        %1968 = vmatprep.subr.bf16.mxu0 0
        %1969 = vmatpush1.bf16.msra.mxu0 0
        %1970 = vmatprep.subr.bf16.mxu0 0
        %1971 = vmatpush1.bf16.msra.mxu0 0
        %1972 = vmatprep.subr.bf16.mxu0 0
        %1973 = vmatpush1.bf16.msra.mxu0 0
        %1974 = vmatprep.subr.bf16.mxu0 0
        %1975 = vmatpush1.bf16.msra.mxu0 0
        %1976 = vmatprep.subr.bf16.mxu0 0
        %1977 = vmatpush1.bf16.msra.mxu0 0
        %1978 = vmatprep.subr.bf16.mxu0 0
        %1979 = vmatpush1.bf16.msra.mxu0 0
        %1980 = vmatprep.subr.bf16.mxu0 0
        %1981 = vmatpush1.bf16.msra.mxu0 0
        %1982 = vmatprep.subr.bf16.mxu0 0
        %1983 = vmatpush1.bf16.msra.mxu0 0
        %1984 = vmatprep.subr.bf16.mxu0 0
        %1985 = vmatpush1.bf16.msra.mxu0 0
        %1986 = vmatprep.subr.bf16.mxu0 0
        %1987 = vmatpush1.bf16.msra.mxu0 0
        %1988 = vmatprep.subr.bf16.mxu0 0
        %1989 = vmatpush1.bf16.msra.mxu0 0
        %1990 = vmatprep.subr.bf16.mxu0 0
        %1991 = vmatpush1.bf16.msra.mxu0 0
        %1992 = vmatprep.subr.bf16.mxu0 0
        %1993 = vmatpush1.bf16.msra.mxu0 0
        %1994 = vmatprep.mubr.bf16.mxu0 0
        %1995 = vmatmul.mubr.bf16.gmra.mrb[0].mxu0 %v1960
        %v1996 = vpop.f32.mrb[0].mxu0
        %v1997 = vadd.f32 0.0, %v1996
        %v1998 = vpop.f32.mrb[0].mxu0
        %v1999 = vpop.f32.mrb[0].mxu0
        %v2000 = vpop.f32.mrb[0].mxu0
        %2001 = vdwg.mxu0
        %v2002 = vadd.f32 %v1489, %v1997
        %s2003 = scalar_lea.vmem %s3, 192
        %v2004 = vld [vmem:[%s2003] sm:$0xf]
        %v2005 = vld [vmem:[%s2003 + $0x4] sm:$0xf]
        %v2006 = vld [vmem:[%s2003 + $0x8] sm:$0xf]
        %v2007 = vld [vmem:[%s2003 + $0xc] sm:$0xf]
        %v2008 = vld [vmem:[%s2003 + $0x10] sm:$0xf]
        %v2009 = vld [vmem:[%s2003 + $0x14] sm:$0xf]
        %v2010 = vld [vmem:[%s2003 + $0x18] sm:$0xf]
        %v2011 = vld [vmem:[%s2003 + $0x1c] sm:$0xf]
        %v2012 = vld [vmem:[%s2003 + $0x20] sm:$0xf]
        %v2013 = vld [vmem:[%s2003 + $0x24] sm:$0xf]
        %v2014 = vld [vmem:[%s2003 + $0x28] sm:$0xf]
        %v2015 = vld [vmem:[%s2003 + $0x2c] sm:$0xf]
        %v2016 = vld [vmem:[%s2003 + $0x30] sm:$0xf]
        %v2017 = vld [vmem:[%s2003 + $0x34] sm:$0xf]
        %v2018 = vld [vmem:[%s2003 + $0x38] sm:$0xf]
        %v2019 = vld [vmem:[%s2003 + $0x3c] sm:$0xf]
        %s2020 = scalar_lea.vmem %s4, 3
        %v2021 = vld [vmem:[%s2020] sm:$0x1]
        %v2023 = vlaneseq
        %v2024 = vshrl.u32 %v2023, 7
        %v2025 = vsub.s32 0, %v2024
        %v2026 = vrot.slane %v2021, %v2025
        %v2044 = vunpack.c.l.b16 %v2004
        %v2045 = vunpack.c.l.b16 %v2005
        %v2046 = vunpack.c.l.b16 %v2006
        %v2047 = vunpack.c.l.b16 %v2007
        %v2048 = vunpack.c.l.b16 %v2008
        %v2049 = vunpack.c.l.b16 %v2009
        %v2050 = vunpack.c.l.b16 %v2010
        %v2051 = vunpack.c.l.b16 %v2011
        %v2052 = vunpack.c.l.b16 %v2012
        %v2053 = vunpack.c.l.b16 %v2013
        %v2054 = vunpack.c.l.b16 %v2014
        %v2055 = vunpack.c.l.b16 %v2015
        %v2056 = vunpack.c.l.b16 %v2016
        %v2057 = vunpack.c.l.b16 %v2017
        %v2058 = vunpack.c.l.b16 %v2018
        %v2059 = vunpack.c.l.b16 %v2019
        %v2060 = vpack.c.b16 %v2045, %v2044
        %v2061 = vpack.c.b16 %v2047, %v2046
        %v2062 = vpack.c.b16 %v2049, %v2048
        %v2063 = vpack.c.b16 %v2051, %v2050
        %v2064 = vpack.c.b16 %v2053, %v2052
        %v2065 = vpack.c.b16 %v2055, %v2054
        %v2066 = vpack.c.b16 %v2057, %v2056
        %v2067 = vpack.c.b16 %v2059, %v2058
        %2076 = vmatprep.subr.bf16.mxu0 0
        %2077 = vmatpush1.bf16.msra.mxu0 %v2060
        %2078 = vmatprep.subr.bf16.mxu0 0
        %2079 = vmatpush1.bf16.msra.mxu0 %v2061
        %2080 = vmatprep.subr.bf16.mxu0 0
        %2081 = vmatpush1.bf16.msra.mxu0 %v2062
        %2082 = vmatprep.subr.bf16.mxu0 0
        %2083 = vmatpush1.bf16.msra.mxu0 %v2063
        %2084 = vmatprep.subr.bf16.mxu0 0
        %2085 = vmatpush1.bf16.msra.mxu0 %v2064
        %2086 = vmatprep.subr.bf16.mxu0 0
        %2087 = vmatpush1.bf16.msra.mxu0 %v2065
        %2088 = vmatprep.subr.bf16.mxu0 0
        %2089 = vmatpush1.bf16.msra.mxu0 %v2066
        %2090 = vmatprep.subr.bf16.mxu0 0
        %2091 = vmatpush1.bf16.msra.mxu0 %v2067
        %2092 = vmatprep.subr.bf16.mxu0 0
        %2093 = vmatpush1.bf16.msra.mxu0 0
        %2094 = vmatprep.subr.bf16.mxu0 0
        %2095 = vmatpush1.bf16.msra.mxu0 0
        %2096 = vmatprep.subr.bf16.mxu0 0
        %2097 = vmatpush1.bf16.msra.mxu0 0
        %2098 = vmatprep.subr.bf16.mxu0 0
        %2099 = vmatpush1.bf16.msra.mxu0 0
        %2100 = vmatprep.subr.bf16.mxu0 0
        %2101 = vmatpush1.bf16.msra.mxu0 0
        %2102 = vmatprep.subr.bf16.mxu0 0
        %2103 = vmatpush1.bf16.msra.mxu0 0
        %2104 = vmatprep.subr.bf16.mxu0 0
        %2105 = vmatpush1.bf16.msra.mxu0 0
        %2106 = vmatprep.subr.bf16.mxu0 0
        %2107 = vmatpush1.bf16.msra.mxu0 0
        %2108 = vmatprep.mubr.bf16.mxu0 0
        %2109 = vmatmul.mubr.bf16.gmra.mrb[0].mxu0 %v475
        %v2110 = vpop.f32.mrb[0].mxu0
        %v2111 = vadd.f32 %v2026, %v2110
        %v2112 = vpop.f32.mrb[0].mxu0
        %v2113 = vpop.f32.mrb[0].mxu0
        %v2114 = vpop.f32.mrb[0].mxu0
        %2115 = vdwg.mxu0
        %s2116 = scalar_lea.vmem %s5, 192
        %v2117 = vld [vmem:[%s2116] sm:$0xf]
        %v2118 = vld [vmem:[%s2116 + $0x4] sm:$0xf]
        %v2119 = vld [vmem:[%s2116 + $0x8] sm:$0xf]
        %v2120 = vld [vmem:[%s2116 + $0xc] sm:$0xf]
        %v2121 = vld [vmem:[%s2116 + $0x10] sm:$0xf]
        %v2122 = vld [vmem:[%s2116 + $0x14] sm:$0xf]
        %v2123 = vld [vmem:[%s2116 + $0x18] sm:$0xf]
        %v2124 = vld [vmem:[%s2116 + $0x1c] sm:$0xf]
        %v2125 = vld [vmem:[%s2116 + $0x20] sm:$0xf]
        %v2126 = vld [vmem:[%s2116 + $0x24] sm:$0xf]
        %v2127 = vld [vmem:[%s2116 + $0x28] sm:$0xf]
        %v2128 = vld [vmem:[%s2116 + $0x2c] sm:$0xf]
        %v2129 = vld [vmem:[%s2116 + $0x30] sm:$0xf]
        %v2130 = vld [vmem:[%s2116 + $0x34] sm:$0xf]
        %v2131 = vld [vmem:[%s2116 + $0x38] sm:$0xf]
        %v2132 = vld [vmem:[%s2116 + $0x3c] sm:$0xf]
        %s2133 = scalar_lea.vmem %s6, 3
        %v2134 = vld [vmem:[%s2133] sm:$0x1]
        %v2136 = vlaneseq
        %v2137 = vshrl.u32 %v2136, 7
        %v2138 = vsub.s32 0, %v2137
        %v2139 = vrot.slane %v2134, %v2138
        %v2157 = vunpack.c.l.b16 %v2117
        %v2158 = vunpack.c.l.b16 %v2118
        %v2159 = vunpack.c.l.b16 %v2119
        %v2160 = vunpack.c.l.b16 %v2120
        %v2161 = vunpack.c.l.b16 %v2121
        %v2162 = vunpack.c.l.b16 %v2122
        %v2163 = vunpack.c.l.b16 %v2123
        %v2164 = vunpack.c.l.b16 %v2124
        %v2165 = vunpack.c.l.b16 %v2125
        %v2166 = vunpack.c.l.b16 %v2126
        %v2167 = vunpack.c.l.b16 %v2127
        %v2168 = vunpack.c.l.b16 %v2128
        %v2169 = vunpack.c.l.b16 %v2129
        %v2170 = vunpack.c.l.b16 %v2130
        %v2171 = vunpack.c.l.b16 %v2131
        %v2172 = vunpack.c.l.b16 %v2132
        %v2173 = vpack.c.b16 %v2158, %v2157
        %v2174 = vpack.c.b16 %v2160, %v2159
        %v2175 = vpack.c.b16 %v2162, %v2161
        %v2176 = vpack.c.b16 %v2164, %v2163
        %v2177 = vpack.c.b16 %v2166, %v2165
        %v2178 = vpack.c.b16 %v2168, %v2167
        %v2179 = vpack.c.b16 %v2170, %v2169
        %v2180 = vpack.c.b16 %v2172, %v2171
        %2189 = vmatprep.subr.bf16.mxu0 0
        %2190 = vmatpush1.bf16.msra.mxu0 %v2173
        %2191 = vmatprep.subr.bf16.mxu0 0
        %2192 = vmatpush1.bf16.msra.mxu0 %v2174
        %2193 = vmatprep.subr.bf16.mxu0 0
        %2194 = vmatpush1.bf16.msra.mxu0 %v2175
        %2195 = vmatprep.subr.bf16.mxu0 0
        %2196 = vmatpush1.bf16.msra.mxu0 %v2176
        %2197 = vmatprep.subr.bf16.mxu0 0
        %2198 = vmatpush1.bf16.msra.mxu0 %v2177
        %2199 = vmatprep.subr.bf16.mxu0 0
        %2200 = vmatpush1.bf16.msra.mxu0 %v2178
        %2201 = vmatprep.subr.bf16.mxu0 0
        %2202 = vmatpush1.bf16.msra.mxu0 %v2179
        %2203 = vmatprep.subr.bf16.mxu0 0
        %2204 = vmatpush1.bf16.msra.mxu0 %v2180
        %2205 = vmatprep.subr.bf16.mxu0 0
        %2206 = vmatpush1.bf16.msra.mxu0 0
        %2207 = vmatprep.subr.bf16.mxu0 0
        %2208 = vmatpush1.bf16.msra.mxu0 0
        %2209 = vmatprep.subr.bf16.mxu0 0
        %2210 = vmatpush1.bf16.msra.mxu0 0
        %2211 = vmatprep.subr.bf16.mxu0 0
        %2212 = vmatpush1.bf16.msra.mxu0 0
        %2213 = vmatprep.subr.bf16.mxu0 0
        %2214 = vmatpush1.bf16.msra.mxu0 0
        %2215 = vmatprep.subr.bf16.mxu0 0
        %2216 = vmatpush1.bf16.msra.mxu0 0
        %2217 = vmatprep.subr.bf16.mxu0 0
        %2218 = vmatpush1.bf16.msra.mxu0 0
        %2219 = vmatprep.subr.bf16.mxu0 0
        %2220 = vmatpush1.bf16.msra.mxu0 0
        %2221 = vmatprep.mubr.bf16.mxu0 0
        %2222 = vmatmul.mubr.bf16.gmra.mrb[0].mxu0 %v476
        %v2223 = vpop.f32.mrb[0].mxu0
        %v2224 = vadd.f32 %v2139, %v2223
        %v2225 = vpop.f32.mrb[0].mxu0
        %v2226 = vpop.f32.mrb[0].mxu0
        %v2227 = vadd.f32 %v2139, %v2226
        %v2228 = vpop.f32.mrb[0].mxu0
        %2229 = vdwg.mxu0
        %s2230 = scalar_lea.vmem %s7, 192
        %v2231 = vld [vmem:[%s2230] sm:$0xf]
        %v2232 = vld [vmem:[%s2230 + $0x4] sm:$0xf]
        %v2233 = vld [vmem:[%s2230 + $0x8] sm:$0xf]
        %v2234 = vld [vmem:[%s2230 + $0xc] sm:$0xf]
        %v2235 = vld [vmem:[%s2230 + $0x10] sm:$0xf]
        %v2236 = vld [vmem:[%s2230 + $0x14] sm:$0xf]
        %v2237 = vld [vmem:[%s2230 + $0x18] sm:$0xf]
        %v2238 = vld [vmem:[%s2230 + $0x1c] sm:$0xf]
        %v2239 = vld [vmem:[%s2230 + $0x20] sm:$0xf]
        %v2240 = vld [vmem:[%s2230 + $0x24] sm:$0xf]
        %v2241 = vld [vmem:[%s2230 + $0x28] sm:$0xf]
        %v2242 = vld [vmem:[%s2230 + $0x2c] sm:$0xf]
        %v2243 = vld [vmem:[%s2230 + $0x30] sm:$0xf]
        %v2244 = vld [vmem:[%s2230 + $0x34] sm:$0xf]
        %v2245 = vld [vmem:[%s2230 + $0x38] sm:$0xf]
        %v2246 = vld [vmem:[%s2230 + $0x3c] sm:$0xf]
        %s2247 = scalar_lea.vmem %s8, 3
        %v2248 = vld [vmem:[%s2247] sm:$0x1]
        %v2250 = vlaneseq
        %v2251 = vshrl.u32 %v2250, 7
        %v2252 = vsub.s32 0, %v2251
        %v2253 = vrot.slane %v2248, %v2252
        %v2271 = vunpack.c.l.b16 %v2231
        %v2272 = vunpack.c.l.b16 %v2232
        %v2273 = vunpack.c.l.b16 %v2233
        %v2274 = vunpack.c.l.b16 %v2234
        %v2275 = vunpack.c.l.b16 %v2235
        %v2276 = vunpack.c.l.b16 %v2236
        %v2277 = vunpack.c.l.b16 %v2237
        %v2278 = vunpack.c.l.b16 %v2238
        %v2279 = vunpack.c.l.b16 %v2239
        %v2280 = vunpack.c.l.b16 %v2240
        %v2281 = vunpack.c.l.b16 %v2241
        %v2282 = vunpack.c.l.b16 %v2242
        %v2283 = vunpack.c.l.b16 %v2243
        %v2284 = vunpack.c.l.b16 %v2244
        %v2285 = vunpack.c.l.b16 %v2245
        %v2286 = vunpack.c.l.b16 %v2246
        %v2287 = vpack.c.b16 %v2272, %v2271
        %v2288 = vpack.c.b16 %v2274, %v2273
        %v2289 = vpack.c.b16 %v2276, %v2275
        %v2290 = vpack.c.b16 %v2278, %v2277
        %v2291 = vpack.c.b16 %v2280, %v2279
        %v2292 = vpack.c.b16 %v2282, %v2281
        %v2293 = vpack.c.b16 %v2284, %v2283
        %v2294 = vpack.c.b16 %v2286, %v2285
        %2303 = vmatprep.subr.bf16.mxu0 0
        %2304 = vmatpush1.bf16.msra.mxu0 %v2287
        %2305 = vmatprep.subr.bf16.mxu0 0
        %2306 = vmatpush1.bf16.msra.mxu0 %v2288
        %2307 = vmatprep.subr.bf16.mxu0 0
        %2308 = vmatpush1.bf16.msra.mxu0 %v2289
        %2309 = vmatprep.subr.bf16.mxu0 0
        %2310 = vmatpush1.bf16.msra.mxu0 %v2290
        %2311 = vmatprep.subr.bf16.mxu0 0
        %2312 = vmatpush1.bf16.msra.mxu0 %v2291
        %2313 = vmatprep.subr.bf16.mxu0 0
        %2314 = vmatpush1.bf16.msra.mxu0 %v2292
        %2315 = vmatprep.subr.bf16.mxu0 0
        %2316 = vmatpush1.bf16.msra.mxu0 %v2293
        %2317 = vmatprep.subr.bf16.mxu0 0
        %2318 = vmatpush1.bf16.msra.mxu0 %v2294
        %2319 = vmatprep.subr.bf16.mxu0 0
        %2320 = vmatpush1.bf16.msra.mxu0 0
        %2321 = vmatprep.subr.bf16.mxu0 0
        %2322 = vmatpush1.bf16.msra.mxu0 0
        %2323 = vmatprep.subr.bf16.mxu0 0
        %2324 = vmatpush1.bf16.msra.mxu0 0
        %2325 = vmatprep.subr.bf16.mxu0 0
        %2326 = vmatpush1.bf16.msra.mxu0 0
        %2327 = vmatprep.subr.bf16.mxu0 0
        %2328 = vmatpush1.bf16.msra.mxu0 0
        %2329 = vmatprep.subr.bf16.mxu0 0
        %2330 = vmatpush1.bf16.msra.mxu0 0
        %2331 = vmatprep.subr.bf16.mxu0 0
        %2332 = vmatpush1.bf16.msra.mxu0 0
        %2333 = vmatprep.subr.bf16.mxu0 0
        %2334 = vmatpush1.bf16.msra.mxu0 0
        %2335 = vmatprep.mubr.bf16.mxu0 0
        %2336 = vmatmul.mubr.bf16.gmra.mrb[0].mxu0 %v476
        %v2337 = vpop.f32.mrb[0].mxu0
        %v2338 = vadd.f32 %v2253, %v2337
        %v2339 = vpop.f32.mrb[0].mxu0
        %v2340 = vpop.f32.mrb[0].mxu0
        %v2341 = vadd.f32 %v2253, %v2340
        %v2342 = vpop.f32.mrb[0].mxu0
        %2343 = vdwg.mxu0
        %v2344 = vpack.c.bf16 %v2111, %v2111
        %v2345 = vpack.c.bf16 %v2227, %v2224
        %v2347 = vsel %vm814, %v2344, 0
        %v2350 = vsel %vm814, %v2345, 0
        %2352 = vmatprep.subr.bf16.mxu0 0
        %2353 = vmatpush1.bf16.xpose.msra.mxu0 %v2350
        %2354 = vmatprep.subr.bf16.mxu0 0
        %2355 = vmatpush1.bf16.xpose.msra.mxu0 0
        %2356 = vmatprep.subr.bf16.mxu0 0
        %2357 = vmatpush1.bf16.xpose.msra.mxu0 0
        %2358 = vmatprep.subr.bf16.mxu0 0
        %2359 = vmatpush1.bf16.xpose.msra.mxu0 0
        %2360 = vmatprep.subr.bf16.mxu0 0
        %2361 = vmatpush1.bf16.xpose.msra.mxu0 0
        %2362 = vmatprep.subr.bf16.mxu0 0
        %2363 = vmatpush1.bf16.xpose.msra.mxu0 0
        %2364 = vmatprep.subr.bf16.mxu0 0
        %2365 = vmatpush1.bf16.xpose.msra.mxu0 0
        %2366 = vmatprep.subr.bf16.mxu0 0
        %2367 = vmatpush1.bf16.xpose.msra.mxu0 0
        %2368 = vmatprep.subr.bf16.mxu0 0
        %2369 = vmatpush1.bf16.xpose.msra.mxu0 0
        %2370 = vmatprep.subr.bf16.mxu0 0
        %2371 = vmatpush1.bf16.xpose.msra.mxu0 0
        %2372 = vmatprep.subr.bf16.mxu0 0
        %2373 = vmatpush1.bf16.xpose.msra.mxu0 0
        %2374 = vmatprep.subr.bf16.mxu0 0
        %2375 = vmatpush1.bf16.xpose.msra.mxu0 0
        %2376 = vmatprep.subr.bf16.mxu0 0
        %2377 = vmatpush1.bf16.xpose.msra.mxu0 0
        %2378 = vmatprep.subr.bf16.mxu0 0
        %2379 = vmatpush1.bf16.xpose.msra.mxu0 0
        %2380 = vmatprep.subr.bf16.mxu0 0
        %2381 = vmatpush1.bf16.xpose.msra.mxu0 0
        %2382 = vmatprep.subr.bf16.mxu0 0
        %2383 = vmatpush1.bf16.xpose.msra.mxu0 0
        %2384 = vmatprep.mubr.bf16.mxu0 0
        %2385 = vmatmul.mubr.bf16.gmra.mrb[0].mxu0 %v2347
        %v2386 = vpop.f32.mrb[0].mxu0
        %v2387 = vadd.f32 0.0, %v2386
        %v2388 = vpop.f32.mrb[0].mxu0
        %v2389 = vpop.f32.mrb[0].mxu0
        %v2390 = vpop.f32.mrb[0].mxu0
        %2391 = vdwg.mxu0
        %v2392 = vmul.f32 %v2387, 0.17677669
        %v2393 = vadd.f32 %v2392, %v866
        %v2394 = vsel %vm869, %v2393, -inf
        %2395 = vmax.xlane.f32.xlu0 %v2394
        %v2396 = vpop.xlane.xlu0 %2395
        %v2397 = vsub.f32 %v2393, %v2396
        %v2398 = vmul.f32 %v2397, 1.442695
        %v2399 = vpow.pop %v2398
        %v2400 = vsel %vm869, %v2399, 0.0
        %2401 = vadd.xlane.f32.xlu0 %v2400
        %v2402 = vpop.xlane.xlu0 %2401
        %v2403 = vrcp.pop %v2402
        %v2404 = vmul.f32 %v2399, %v2403
        %v2405 = vpack.c.bf16 %v2404, %v2404
        %v2406 = vpack.c.bf16 %v2341, %v2338
        %v2408 = vsel %vm869, %v2405, 0
        %2410 = vmatprep.subr.bf16.mxu0 0
        %2411 = vmatpush1.bf16.msra.mxu0 %v2406
        %2412 = vmatprep.subr.bf16.mxu0 0
        %2413 = vmatpush1.bf16.msra.mxu0 0
        %2414 = vmatprep.subr.bf16.mxu0 0
        %2415 = vmatpush1.bf16.msra.mxu0 0
        %2416 = vmatprep.subr.bf16.mxu0 0
        %2417 = vmatpush1.bf16.msra.mxu0 0
        %2418 = vmatprep.subr.bf16.mxu0 0
        %2419 = vmatpush1.bf16.msra.mxu0 0
        %2420 = vmatprep.subr.bf16.mxu0 0
        %2421 = vmatpush1.bf16.msra.mxu0 0
        %2422 = vmatprep.subr.bf16.mxu0 0
        %2423 = vmatpush1.bf16.msra.mxu0 0
        %2424 = vmatprep.subr.bf16.mxu0 0
        %2425 = vmatpush1.bf16.msra.mxu0 0
        %2426 = vmatprep.subr.bf16.mxu0 0
        %2427 = vmatpush1.bf16.msra.mxu0 0
        %2428 = vmatprep.subr.bf16.mxu0 0
        %2429 = vmatpush1.bf16.msra.mxu0 0
        %2430 = vmatprep.subr.bf16.mxu0 0
        %2431 = vmatpush1.bf16.msra.mxu0 0
        %2432 = vmatprep.subr.bf16.mxu0 0
        %2433 = vmatpush1.bf16.msra.mxu0 0
        %2434 = vmatprep.subr.bf16.mxu0 0
        %2435 = vmatpush1.bf16.msra.mxu0 0
        %2436 = vmatprep.subr.bf16.mxu0 0
        %2437 = vmatpush1.bf16.msra.mxu0 0
        %2438 = vmatprep.subr.bf16.mxu0 0
        %2439 = vmatpush1.bf16.msra.mxu0 0
        %2440 = vmatprep.subr.bf16.mxu0 0
        %2441 = vmatpush1.bf16.msra.mxu0 0
        %2442 = vmatprep.mubr.bf16.mxu0 0
        %2443 = vmatmul.mubr.bf16.gmra.mrb[0].mxu0 %v2408
        %v2444 = vpop.f32.mrb[0].mxu0
        %v2445 = vadd.f32 0.0, %v2444
        %v2446 = vpop.f32.mrb[0].mxu0
        %v2447 = vpop.f32.mrb[0].mxu0
        %v2448 = vpop.f32.mrb[0].mxu0
        %2449 = vdwg.mxu0
        %v2450 = vpack.c.bf16 %v2445, %v2445
        %s2451 = scalar_lea.vmem %s9, 48
        %v2452 = vld [vmem:[%s2451] sm:$0xf]
        %v2453 = vld [vmem:[%s2451 + $0x4] sm:$0xf]
        %v2454 = vld [vmem:[%s2451 + $0x8] sm:$0xf]
        %v2455 = vld [vmem:[%s2451 + $0xc] sm:$0xf]
        %v2460 = vunpack.c.l.b16 %v2452
        %v2461 = vunpack.c.l.b16 %v2453
        %v2462 = vunpack.c.l.b16 %v2454
        %v2463 = vunpack.c.l.b16 %v2455
        %v2464 = vpack.c.b16 %v2461, %v2460
        %v2465 = vpack.c.b16 %v2463, %v2462
        %v2469 = vsel %vm814, %v2450, 0
        %2471 = vmatprep.subr.bf16.mxu0 0
        %2472 = vmatpush1.bf16.msra.mxu0 %v2464
        %2473 = vmatprep.subr.bf16.mxu0 0
        %2474 = vmatpush1.bf16.msra.mxu0 %v2465
        %2475 = vmatprep.subr.bf16.mxu0 0
        %2476 = vmatpush1.bf16.msra.mxu0 0
        %2477 = vmatprep.subr.bf16.mxu0 0
        %2478 = vmatpush1.bf16.msra.mxu0 0
        %2479 = vmatprep.subr.bf16.mxu0 0
        %2480 = vmatpush1.bf16.msra.mxu0 0
        %2481 = vmatprep.subr.bf16.mxu0 0
        %2482 = vmatpush1.bf16.msra.mxu0 0
        %2483 = vmatprep.subr.bf16.mxu0 0
        %2484 = vmatpush1.bf16.msra.mxu0 0
        %2485 = vmatprep.subr.bf16.mxu0 0
        %2486 = vmatpush1.bf16.msra.mxu0 0
        %2487 = vmatprep.subr.bf16.mxu0 0
        %2488 = vmatpush1.bf16.msra.mxu0 0
        %2489 = vmatprep.subr.bf16.mxu0 0
        %2490 = vmatpush1.bf16.msra.mxu0 0
        %2491 = vmatprep.subr.bf16.mxu0 0
        %2492 = vmatpush1.bf16.msra.mxu0 0
        %2493 = vmatprep.subr.bf16.mxu0 0
        %2494 = vmatpush1.bf16.msra.mxu0 0
        %2495 = vmatprep.subr.bf16.mxu0 0
        %2496 = vmatpush1.bf16.msra.mxu0 0
        %2497 = vmatprep.subr.bf16.mxu0 0
        %2498 = vmatpush1.bf16.msra.mxu0 0
        %2499 = vmatprep.subr.bf16.mxu0 0
        %2500 = vmatpush1.bf16.msra.mxu0 0
        %2501 = vmatprep.subr.bf16.mxu0 0
        %2502 = vmatpush1.bf16.msra.mxu0 0
        %2503 = vmatprep.mubr.bf16.mxu0 0
        %2504 = vmatmul.mubr.bf16.gmra.mrb[0].mxu0 %v2469
        %v2505 = vpop.f32.mrb[0].mxu0
        %v2506 = vadd.f32 0.0, %v2505
        %v2507 = vpop.f32.mrb[0].mxu0
        %v2508 = vpop.f32.mrb[0].mxu0
        %v2509 = vpop.f32.mrb[0].mxu0
        %2510 = vdwg.mxu0
        %v2511 = vadd.f32 %v2002, %v2506
        %v2512 = vld [vmem:[%s10] sm:$0x1]
        %v2514 = vlaneseq
        %v2515 = vshrl.u32 %v2514, 7
        %v2516 = vsub.s32 0, %v2515
        %v2517 = vrot.slane %v2512, %v2516
        %v2519 = vadd.f32 %v2511, %v2517
        %v2520 = vadd.f32 %v2519, %v471
        %2521 = vadd.xlane.f32.xlu0 %v2520
        %v2522 = vpop.xlane.xlu0 %2521
        %v2523 = vrcp.pop 128.0
        %v2524 = vmul.f32 %v2522, %v2523
        %v2525 = vsub.f32 %v2520, %v2524
        %v2526 = vmul.f32 %v2525, %v2525
        %2527 = vadd.xlane.f32.xlu0 %v2526
        %v2528 = vpop.xlane.xlu0 %2527
        %v2529 = vmul.f32 %v2528, %v2523
        %v2530 = vadd.f32 %v2529, 1e-12
        %v2531 = vrsqrt.pop %v2530
        %v2532 = vmul.f32 %v2525, %v2531
        %v2533 = vld [vmem:[%s11] sm:$0x1]
        %v2535 = vlaneseq
        %v2536 = vshrl.u32 %v2535, 7
        %v2537 = vsub.s32 0, %v2536
        %v2538 = vrot.slane %v2533, %v2537
        %v2540 = vmul.f32 %v2532, %v2538
        %v2541 = vld [vmem:[%s12] sm:$0x1]
        %v2543 = vlaneseq
        %v2544 = vshrl.u32 %v2543, 7
        %v2545 = vsub.s32 0, %v2544
        %v2546 = vrot.slane %v2541, %v2545
        %v2548 = vadd.f32 %v2540, %v2546
        %2549 = vst [vmem:[%s457] sm:$0xff] %v2548
        %s2550 = sand.u32 %s323, 1
        %s2551 = scalar_lea.sflag [#allocation3], %s2550
        %s2552 = sand.u32 %s323, 1
        %s2553 = smul.addr %s2552, 8
        %s2554 = scalar_lea.vmem [#allocation2], %s2553
        // Predicated region
        $region73: #{tpu_custom_call.1} parent=71 // pred_check
          %p2555 = pneg %p333
        $region74: #{tpu_custom_call.1} parent=71 // pred_check_branch
          %2557 = sbr.rel (%p2555) target = $region76
        $region75: #{tpu_custom_call.1} parent=71 // pred_region
          %s2559 = ssub.s32 128, 128
          %2560 = vsyncadd %s2551, %s2559
          %s2561 = smul.addr %s27, 128
          %s2562 = scalar_lea.hbm %s13, %s2561
          %s2564 = sshll.u32 %s2554, 4
          %s2565 = int_to_ptr.vmem [resolvable:$true] %s2564
          %2567 = dma.vmem_to_hbm [thread:$0]  %s2565, 128, %s2562, %s2551
        $region76: #{tpu_custom_call.1} parent=71 // pred_fallthru
          _
      $region72: #{tpu_custom_call.1} parent=5 // pred_fallthru
        _
      %p2568 = scmp.le.s32.totalorder 2, %s22
      // Predicated region
      $region77: #{tpu_custom_call.1} parent=5 // pred_check
        %p2569 = pneg %p2568
      $region78: #{tpu_custom_call.1} parent=5 // pred_check_branch
        %2571 = sbr.rel (%p2569) target = $region80
      $region79: #{tpu_custom_call.1} parent=5 // pred_region
        %s2572 = ssub.s32 %s22, 2
        // Predicated region
        $region81: #{tpu_custom_call.1} parent=79 // pred_check
          %p2573 = pneg %p339
        $region82: #{tpu_custom_call.1} parent=79 // pred_check_branch
          %2575 = sbr.rel (%p2573) target = $region84
        $region83: #{tpu_custom_call.1} parent=79 // pred_region
          %s2576 = sand.u32 %s324, 1
          %s2577 = scalar_lea.sflag [#allocation3], %s2576
          %s2578 = sand.u32 %s324, 1
          %s2579 = smul.addr %s2578, 8
          %s2580 = scalar_lea.vmem [#allocation2], %s2579
          %2581 = dma.done %s2577, 128
        $region84: #{tpu_custom_call.1} parent=79 // pred_fallthru
          _
      $region80: #{tpu_custom_call.1} parent=5 // pred_fallthru
        _
    $region6: #{tpu_custom_call.1} parent=1 // loop_footer
      %s26 = sadd.s32 1, %s22
    $region7: #{tpu_custom_call.1} parent=1 // loop_footer_branch
      %21 = sbr.rel target = $region3
    $region8: #{tpu_custom_call.1} parent=1 // loop_exit
      _
    %2582 = vsyncpa [#allocation3], 1
    %s2583 = scalar_lea.sflag [#allocation3], 1
    %2584 = vsyncpa %s2583, 1

</llo_original>
